<compile_context>
chip_gen: v6e
topology: v6e:2x2x1
jax: 0.10.0
libtpu: 0.0.40
codegen_flags: <defaults>
</compile_context>

<pallas_src>
import math

import jax
import jax.numpy as jnp
import numpy as np
from jax.experimental import pallas as pl
from jax.experimental.pallas import tpu as pltpu
from jax.scipy.special import gammaln

_GAMMA_A = 0.3
_GAMMA_B = 0.3
_GAMMA_CONST = _GAMMA_A * math.log(_GAMMA_B) - math.lgamma(_GAMMA_A)
_HALF_LOG_2PI = 0.5 * math.log(2.0 * math.pi)
_OUT_LANES = 128   # lane width of the per-sample scalar writeback rows


def _softplus(x):
    # Numerically stable softplus; pure elementwise (VPU + EUP).
    return jnp.maximum(x, 0.0) + jnp.log1p(jnp.exp(-jnp.abs(x)))


# ----------------------------------------------------------------------------
# Fused kernel: Poisson count log-likelihood + log prior + entropy
# (one grid step handles a chunk of Monte-Carlo samples)
# ----------------------------------------------------------------------------
def _tbip_fused_kernel(doc_sel_ref, ideal_sel_ref, doc_ref, obj_ref, ideo_ref,
                       ip_ref, aw_ref, counts_ref, lgam_ref,
                       doc_loc_ref, doc_ls_ref, obj_loc_ref, obj_ls_ref,
                       ideo_loc_ref, ideo_ls_ref, ip_loc_ref, ip_ls_ref,
                       llk_ref, lp_ref, ent_ref):
    sc = doc_ref.shape[0]          # samples handled by this grid step (static)
    lanes = llk_ref.shape[-1]

    aw = aw_ref[...]               # [B, 1]  selected author weights
    counts = counts_ref[...]       # [B, V]
    lgam_sum = jnp.sum(lgam_ref[...])   # sample-invariant lgamma(counts+1) sum

    doc_loc = doc_loc_ref[...]     # [D, K]
    obj_loc = obj_loc_ref[...]     # [K, V]
    ideo_loc = ideo_loc_ref[...]   # [K, V]
    ip_loc = ip_loc_ref[...]       # [A, 1]

    # Sample-invariant variational scale terms, hoisted out of the sample loop.
    def scale_terms(log_scale):
        scale = _softplus(log_scale)
        return 1.0 / scale, jnp.log(scale)

    doc_inv, doc_logs = scale_terms(doc_ls_ref[...])
    obj_inv, obj_logs = scale_terms(obj_ls_ref[...])
    ideo_inv, ideo_logs = scale_terms(ideo_ls_ref[...])
    ip_inv, ip_logs = scale_terms(ip_ls_ref[...])

    def normal_lp(x, mu, inv_sig, log_sig):
        z = (x - mu) * inv_sig
        return -0.5 * z * z - log_sig - _HALF_LOG_2PI

    def std_normal_lp(x):          # Normal(0, 1) prior log prob
        return -0.5 * x * x - _HALF_LOG_2PI

    def gamma_lp(x, log_x):        # Gamma(0.3, 0.3) prior log prob (log reused)
        return _GAMMA_CONST + (_GAMMA_A - 1.0) * log_x - _GAMMA_B * x

    # Tiny, static, fully-unrolled loop over the samples of this chunk.
    for i in range(sc):
        doc_sel = doc_sel_ref[i]   # [B, K]  selected document intensities
        ideal = ideal_sel_ref[i]   # [B, 1]  selected ideal points
        doc = doc_ref[i]           # [D, K]  lognormal samples
        obj = obj_ref[i]           # [K, V]  lognormal samples
        ideo = ideo_ref[i]         # [K, V]  normal samples
        ip = ip_ref[i]             # [A, 1]  normal samples

        # ---- Poisson count log-likelihood: one big [B,K,V] exp + K-reduce ----
        e = jnp.exp(ideal[:, :, None] * ideo[None, :, :])              # [B,K,V]
        rate = jnp.sum(doc_sel[:, :, None] * obj[None, :, :] * e, axis=1)
        rate = aw * rate                                               # [B, V]
        llk = jnp.sum(counts * jnp.log(rate) - rate) - lgam_sum

        # logs of the lognormal samples, shared by prior + entropy terms
        log_doc = jnp.log(doc)
        log_obj = jnp.log(obj)

        # ---- log prior ----
        log_prior = (jnp.sum(gamma_lp(doc, log_doc))
                     + jnp.sum(gamma_lp(obj, log_obj))
                     + jnp.sum(std_normal_lp(ideo))
                     + jnp.sum(std_normal_lp(ip)))

        # ---- entropy (negative variational log prob) ----
        # LogNormal log prob = Normal(log x; mu, sigma) - log x
        var_lp = (jnp.sum(normal_lp(log_doc, doc_loc, doc_inv, doc_logs)
                          - log_doc)
                  + jnp.sum(normal_lp(log_obj, obj_loc, obj_inv, obj_logs)
                            - log_obj)
                  + jnp.sum(normal_lp(ideo, ideo_loc, ideo_inv, ideo_logs))
                  + jnp.sum(normal_lp(ip, ip_loc, ip_inv, ip_logs)))

        # Lane-dense scalar writeback: one unmasked 128-wide store per value.
        llk_ref[0, i:i + 1, :] = jnp.broadcast_to(llk, (1, lanes))
        lp_ref[0, i:i + 1, :] = jnp.broadcast_to(log_prior, (1, lanes))
        ent_ref[0, i:i + 1, :] = jnp.broadcast_to(-var_lp, (1, lanes))


# ----------------------------------------------------------------------------
# TBIP forward (Pallas) — glue + one fused kernel
# ----------------------------------------------------------------------------
def tbip_forward_pallas(params, samples, document_indices, author_indices,
                        counts, num_documents):
    doc_samples, obj_samples, ideo_samples, ip_samples = samples
    S, D, K = doc_samples.shape
    V = obj_samples.shape[-1]
    A = ip_samples.shape[-1]
    B = counts.shape[0]

    # Glue gathers / precompute. Kept in the (jitted) wrapper where XLA fuses
    # them into the single dispatch; in-kernel middle-axis dynamic gathers are
    # not worth the lowering risk at this size.
    doc_sel = doc_samples[:, document_indices]                   # [S, B, K]
    ideal_sel = ip_samples[:, author_indices][..., None]         # [S, B, 1]
    aw_sel = params["author_weights"][author_indices][:, None]   # [B, 1]
    lgam = gammaln(counts + 1.0).astype(jnp.float32)             # [B, V]
    ip_s = ip_samples[..., None]                                 # [S, A, 1]
    ip_loc = params["ip_loc"][:, None]                           # [A, 1]
    ip_ls = params["ip_log_scale"][:, None]                      # [A, 1]

    # Collapse the MC grid: all samples in one launch, split into 2 chunks so
    # a v7x megacore can shard them ("parallel"); neutral on v5e/v6e.
    nb = 2 if (S % 2 == 0 and S >= 2) else 1
    sc = S // nb

    def sample_block(*tail):
        n_tail = len(tail)
        return pl.BlockSpec((sc,) + tail, lambda s: (s,) + (0,) * n_tail)

    def shared_block(*shape):
        n = len(shape)
        return pl.BlockSpec(shape, lambda s: (0,) * n)

    out_shape = jax.ShapeDtypeStruct((nb, sc, _OUT_LANES), jnp.float32)
    out_spec = pl.BlockSpec((1, sc, _OUT_LANES), lambda s: (s, 0, 0))

    llk_o, lp_o, ent_o = pl.pallas_call(
        _tbip_fused_kernel,
        out_shape=(out_shape, out_shape, out_shape),
        grid=(nb,),
        in_specs=[
            sample_block(B, K),       # doc_sel
            sample_block(B, 1),       # ideal_sel
            sample_block(D, K),       # doc_samples
            sample_block(K, V),       # obj_samples
            sample_block(K, V),       # ideo_samples
            sample_block(A, 1),       # ip_samples
            shared_block(B, 1),       # aw_sel
            shared_block(B, V),       # counts
            shared_block(B, V),       # lgamma(counts + 1)
            shared_block(D, K),       # doc_loc
            shared_block(D, K),       # doc_log_scale
            shared_block(K, V),       # obj_loc
            shared_block(K, V),       # obj_log_scale
            shared_block(K, V),       # ideo_loc
            shared_block(K, V),       # ideo_log_scale
            shared_block(A, 1),       # ip_loc
            shared_block(A, 1),       # ip_log_scale
        ],
        out_specs=(out_spec, out_spec, out_spec),
        compiler_params=pltpu.CompilerParams(
            dimension_semantics=("parallel",)),
    )(doc_sel, ideal_sel, doc_samples, obj_samples, ideo_samples, ip_s,
      aw_sel, counts, lgam,
      params["doc_loc"], params["doc_log_scale"],
      params["obj_loc"], params["obj_log_scale"],
      params["ideo_loc"], params["ideo_log_scale"],
      ip_loc, ip_ls)

    llk_s = llk_o[:, :, 0].reshape(S)   # per-sample scalars, in sample order
    lp_s = lp_o[:, :, 0].reshape(S)
    ent_s = ent_o[:, :, 0].reshape(S)

    count_log_likelihood = jnp.mean(llk_s) * (num_documents / B)
    return count_log_likelihood + jnp.mean(lp_s) + jnp.mean(ent_s)


# ----------------------------------------------------------------------------
# Pure-JAX reference (mirrors the PyTorch math) for verification
# ----------------------------------------------------------------------------
def tbip_forward_reference(params, samples, document_indices, author_indices,
                           counts, num_documents):
    doc_samples, obj_samples, ideo_samples, ip_samples = samples
    batch_size = counts.shape[0]

    def normal_lp(x, mu, sig):
        z = (x - mu) / sig
        return -0.5 * z * z - jnp.log(sig) - _HALF_LOG_2PI

    def lognormal_lp(x, mu, sig):
        return normal_lp(jnp.log(x), mu, sig) - jnp.log(x)

    def gamma_lp(x):
        return _GAMMA_CONST + (_GAMMA_A - 1.0) * jnp.log(x) - _GAMMA_B * x

    def std_normal_lp(x):
        return -0.5 * x * x - _HALF_LOG_2PI

    # count log likelihood
    sel_doc = doc_samples[:, document_indices]
    sel_ip = ip_samples[:, author_indices]
    sel_ideo = jnp.exp(sel_ip[:, :, None, None] * ideo_samples[:, None, :, :])
    sel_aw = params["author_weights"][author_indices]
    sel_ideo = sel_aw[None, :, None, None] * sel_ideo
    rate = jnp.sum(sel_doc[:, :, :, None] * obj_samples[:, None, :, :]
                   * sel_ideo, axis=2)
    llk = counts * jnp.log(rate) - rate - gammaln(counts + 1.0)
    cll = jnp.sum(llk, axis=(1, 2)) * (num_documents / batch_size)
    cll = jnp.mean(cll)

    # log prior
    lp = (jnp.sum(gamma_lp(doc_samples), axis=(1, 2))
          + jnp.sum(gamma_lp(obj_samples), axis=(1, 2))
          + jnp.sum(std_normal_lp(ideo_samples), axis=(1, 2))
          + jnp.sum(std_normal_lp(ip_samples), axis=1))
    lp = jnp.mean(lp)

    # entropy
    doc_scale = jax.nn.softplus(params["doc_log_scale"])
    obj_scale = jax.nn.softplus(params["obj_log_scale"])
    ideo_scale = jax.nn.softplus(params["ideo_log_scale"])
    ip_scale = jax.nn.softplus(params["ip_log_scale"])
    ent = -(jnp.sum(lognormal_lp(doc_samples, params["doc_loc"], doc_scale),
                    axis=(1, 2))
            + jnp.sum(lognormal_lp(obj_samples, params["obj_loc"], obj_scale),
                      axis=(1, 2))
            + jnp.sum(normal_lp(ideo_samples, params["ideo_loc"], ideo_scale),
                      axis=(1, 2))
            + jnp.sum(normal_lp(ip_samples, params["ip_loc"], ip_scale),
                      axis=1))
    ent = jnp.mean(ent)

    return cll + lp + ent


# ----------------------------------------------------------------------------
# main
# ----------------------------------------------------------------------------
if __name__ == "__main__":
    # small synthetic shapes
    S = 4          # num_samples (Monte-Carlo)
    D = 16         # num_documents
    K = 8          # num_topics
    V = 128        # num_words
    A = 8          # num_authors
    B = 8          # batch_size

    key = jax.random.PRNGKey(0)
    ks = jax.random.split(key, 12)

    # deterministic parameter init (mirrors VariationalFamily.__init__ shapes)
    initial_document_loc = jax.random.uniform(ks[0], (D, K), jnp.float32,
                                              0.1, 1.1)
    initial_objective_topic_loc = jax.random.uniform(ks[1], (K, V), jnp.float32,
                                                     0.1, 1.1)
    xavier_bound = math.sqrt(6.0 / (K + V))
    params = {
        "author_weights": jax.random.uniform(ks[2], (A,), jnp.float32,
                                             0.5, 1.5),
        "doc_loc": jnp.log(initial_document_loc),
        "doc_log_scale": jnp.zeros((D, K), jnp.float32),
        "obj_loc": jnp.log(initial_objective_topic_loc),
        "obj_log_scale": jnp.zeros((K, V), jnp.float32),
        "ideo_loc": jax.random.uniform(ks[3], (K, V), jnp.float32,
                                       -xavier_bound, xavier_bound),
        "ideo_log_scale": jnp.zeros((K, V), jnp.float32),
        "ip_loc": 0.1 * jax.random.normal(ks[4], (A,), jnp.float32),
        "ip_log_scale": jnp.zeros((A,), jnp.float32),
    }

    # reparameterized sampling (glue; RNG kept in plain JAX)
    # TODO(synk): reparameterized rsample / TensorBoard logging stay outside
    # the kernel (no clean Pallas equivalent for RNG keys / summary writer).
    sp = jax.nn.softplus
    doc_samples = jnp.exp(params["doc_loc"] + sp(params["doc_log_scale"])
                          * jax.random.normal(ks[5], (S, D, K), jnp.float32))
    obj_samples = jnp.exp(params["obj_loc"] + sp(params["obj_log_scale"])
                          * jax.random.normal(ks[6], (S, K, V), jnp.float32))
    ideo_samples = (params["ideo_loc"] + sp(params["ideo_log_scale"])
                    * jax.random.normal(ks[7], (S, K, V), jnp.float32))
    ip_samples = (params["ip_loc"] + sp(params["ip_log_scale"])
                  * jax.random.normal(ks[8], (S, A), jnp.float32))
    samples = [doc_samples, obj_samples, ideo_samples, ip_samples]

    # minibatch data
    document_indices = jax.random.randint(ks[9], (B,), 0, D)
    author_indices = jax.random.randint(ks[10], (B,), 0, A)
    counts = jax.random.poisson(ks[11], 2.0, (B, V)).astype(jnp.float32)

    # jit the wrapper so the glue gathers fuse into a single dispatch
    tbip_forward = jax.jit(tbip_forward_pallas, static_argnums=(5,))
    elbo_pallas = tbip_forward(params, samples, document_indices,
                               author_indices, counts, D)
    elbo_pallas = jax.block_until_ready(elbo_pallas)

    elbo_ref = tbip_forward_reference(params, samples, document_indices,
                                      author_indices, counts, D)
    elbo_ref = jax.block_until_ready(elbo_ref)

    np.testing.assert_allclose(np.asarray(elbo_pallas), np.asarray(elbo_ref),
                               rtol=5e-3, atol=5e-2)
    print("KERNEL_OK")
</pallas_src>

<mosaic_0001>
module attributes {stable_mosaic.version = 11 : i64} {
  func.func @_tbip_fused_kernel(%arg0: i32, %arg1: memref<2x8x8xf32, #tpu.memory_space<vmem>>, %arg2: memref<2x8x1xf32, #tpu.memory_space<vmem>>, %arg3: memref<2x16x8xf32, #tpu.memory_space<vmem>>, %arg4: memref<2x8x128xf32, #tpu.memory_space<vmem>>, %arg5: memref<2x8x128xf32, #tpu.memory_space<vmem>>, %arg6: memref<2x8x1xf32, #tpu.memory_space<vmem>>, %arg7: memref<8x1xf32, #tpu.memory_space<vmem>>, %arg8: memref<8x128xf32, #tpu.memory_space<vmem>>, %arg9: memref<8x128xf32, #tpu.memory_space<vmem>>, %arg10: memref<16x8xf32, #tpu.memory_space<vmem>>, %arg11: memref<16x8xf32, #tpu.memory_space<vmem>>, %arg12: memref<8x128xf32, #tpu.memory_space<vmem>>, %arg13: memref<8x128xf32, #tpu.memory_space<vmem>>, %arg14: memref<8x128xf32, #tpu.memory_space<vmem>>, %arg15: memref<8x128xf32, #tpu.memory_space<vmem>>, %arg16: memref<8x1xf32, #tpu.memory_space<vmem>>, %arg17: memref<8x1xf32, #tpu.memory_space<vmem>>, %arg18: memref<1x2x128xf32, #tpu.memory_space<vmem>>, %arg19: memref<1x2x128xf32, #tpu.memory_space<vmem>>, %arg20: memref<1x2x128xf32, #tpu.memory_space<vmem>>) attributes {dimension_semantics = [#tpu.dimension_semantics<parallel>], iteration_bounds = array<i64: 2>, scalar_prefetch = 0 : i64, scratch_operands = 0 : i64, tpu.core_type = #tpu.core_type<tc>, window_params = [{transform_indices = @transform_0, window_bounds = array<i64: 2, 8, 8>}, {transform_indices = @transform_1, window_bounds = array<i64: 2, 8, 1>}, {transform_indices = @transform_2, window_bounds = array<i64: 2, 16, 8>}, {transform_indices = @transform_3, window_bounds = array<i64: 2, 8, 128>}, {transform_indices = @transform_4, window_bounds = array<i64: 2, 8, 128>}, {transform_indices = @transform_5, window_bounds = array<i64: 2, 8, 1>}, {pipeline_mode = #tpu.pipeline_mode<synchronous>, transform_indices = @transform_6, window_bounds = array<i64: 8, 1>}, {pipeline_mode = #tpu.pipeline_mode<synchronous>, transform_indices = @transform_7, window_bounds = array<i64: 8, 128>}, {pipeline_mode = #tpu.pipeline_mode<synchronous>, transform_indices = @transform_8, window_bounds = array<i64: 8, 128>}, {pipeline_mode = #tpu.pipeline_mode<synchronous>, transform_indices = @transform_9, window_bounds = array<i64: 16, 8>}, {pipeline_mode = #tpu.pipeline_mode<synchronous>, transform_indices = @transform_10, window_bounds = array<i64: 16, 8>}, {pipeline_mode = #tpu.pipeline_mode<synchronous>, transform_indices = @transform_11, window_bounds = array<i64: 8, 128>}, {pipeline_mode = #tpu.pipeline_mode<synchronous>, transform_indices = @transform_12, window_bounds = array<i64: 8, 128>}, {pipeline_mode = #tpu.pipeline_mode<synchronous>, transform_indices = @transform_13, window_bounds = array<i64: 8, 128>}, {pipeline_mode = #tpu.pipeline_mode<synchronous>, transform_indices = @transform_14, window_bounds = array<i64: 8, 128>}, {pipeline_mode = #tpu.pipeline_mode<synchronous>, transform_indices = @transform_15, window_bounds = array<i64: 8, 1>}, {pipeline_mode = #tpu.pipeline_mode<synchronous>, transform_indices = @transform_16, window_bounds = array<i64: 8, 1>}, {transform_indices = @transform_17, window_bounds = array<i64: 1, 2, 128>}, {transform_indices = @transform_18, window_bounds = array<i64: 1, 2, 128>}, {transform_indices = @transform_19, window_bounds = array<i64: 1, 2, 128>}]} {
    %c0 = arith.constant 0 : index
    %c0_0 = arith.constant 0 : index
    %0 = vector.load %arg7[%c0, %c0_0] : memref<8x1xf32, #tpu.memory_space<vmem>>, vector<8x1xf32>
    %c0_1 = arith.constant 0 : index
    %c0_2 = arith.constant 0 : index
    %1 = vector.load %arg8[%c0_1, %c0_2] : memref<8x128xf32, #tpu.memory_space<vmem>>, vector<8x128xf32>
    %c0_3 = arith.constant 0 : index
    %c0_4 = arith.constant 0 : index
    %2 = vector.load %arg9[%c0_3, %c0_4] : memref<8x128xf32, #tpu.memory_space<vmem>>, vector<8x128xf32>
    %3 = vector.shape_cast %2 : vector<8x128xf32> to vector<1x8x128xf32>
    %cst = arith.constant dense<0.000000e+00> : vector<1xf32>
    %4 = vector.multi_reduction <add>, %3, %cst [1, 2] : vector<1x8x128xf32> to vector<1xf32>
    %5 = vector.shape_cast %4 : vector<1xf32> to vector<1x1x1xf32>
    %6 = vector.extract %5[0, 0, 0] : f32 from vector<1x1x1xf32>
    %c0_5 = arith.constant 0 : index
    %c0_6 = arith.constant 0 : index
    %7 = vector.load %arg10[%c0_5, %c0_6] : memref<16x8xf32, #tpu.memory_space<vmem>>, vector<16x8xf32>
    %c0_7 = arith.constant 0 : index
    %c0_8 = arith.constant 0 : index
    %8 = vector.load %arg12[%c0_7, %c0_8] : memref<8x128xf32, #tpu.memory_space<vmem>>, vector<8x128xf32>
    %c0_9 = arith.constant 0 : index
    %c0_10 = arith.constant 0 : index
    %9 = vector.load %arg14[%c0_9, %c0_10] : memref<8x128xf32, #tpu.memory_space<vmem>>, vector<8x128xf32>
    %c0_11 = arith.constant 0 : index
    %c0_12 = arith.constant 0 : index
    %10 = vector.load %arg16[%c0_11, %c0_12] : memref<8x1xf32, #tpu.memory_space<vmem>>, vector<8x1xf32>
    %c0_13 = arith.constant 0 : index
    %c0_14 = arith.constant 0 : index
    %11 = vector.load %arg11[%c0_13, %c0_14] : memref<16x8xf32, #tpu.memory_space<vmem>>, vector<16x8xf32>
    %cst_15 = arith.constant 0.000000e+00 : f32
    %12 = vector.broadcast %cst_15 : f32 to vector<16x8xf32>
    %13 = arith.maximumf %11, %12 : vector<16x8xf32>
    %14 = math.absf %11 : vector<16x8xf32>
    %cst_16 = arith.constant 0.000000e+00 : f32
    %15 = vector.broadcast %cst_16 : f32 to vector<16x8xf32>
    %16 = arith.subf %15, %14 : vector<16x8xf32>
    %17 = math.exp %16 : vector<16x8xf32>
    %18 = math.log1p %17 : vector<16x8xf32>
    %19 = arith.addf %13, %18 : vector<16x8xf32>
    %cst_17 = arith.constant 1.000000e+00 : f32
    %20 = vector.broadcast %cst_17 : f32 to vector<16x8xf32>
    %21 = arith.divf %20, %19 : vector<16x8xf32>
    %22 = math.log %19 : vector<16x8xf32>
    %c0_18 = arith.constant 0 : index
    %c0_19 = arith.constant 0 : index
    %23 = vector.load %arg13[%c0_18, %c0_19] : memref<8x128xf32, #tpu.memory_space<vmem>>, vector<8x128xf32>
    %cst_20 = arith.constant 0.000000e+00 : f32
    %24 = vector.broadcast %cst_20 : f32 to vector<8x128xf32>
    %25 = arith.maximumf %23, %24 : vector<8x128xf32>
    %26 = math.absf %23 : vector<8x128xf32>
    %cst_21 = arith.constant 0.000000e+00 : f32
    %27 = vector.broadcast %cst_21 : f32 to vector<8x128xf32>
    %28 = arith.subf %27, %26 : vector<8x128xf32>
    %29 = math.exp %28 : vector<8x128xf32>
    %30 = math.log1p %29 : vector<8x128xf32>
    %31 = arith.addf %25, %30 : vector<8x128xf32>
    %cst_22 = arith.constant 1.000000e+00 : f32
    %32 = vector.broadcast %cst_22 : f32 to vector<8x128xf32>
    %33 = arith.divf %32, %31 : vector<8x128xf32>
    %34 = math.log %31 : vector<8x128xf32>
    %c0_23 = arith.constant 0 : index
    %c0_24 = arith.constant 0 : index
    %35 = vector.load %arg15[%c0_23, %c0_24] : memref<8x128xf32, #tpu.memory_space<vmem>>, vector<8x128xf32>
    %cst_25 = arith.constant 0.000000e+00 : f32
    %36 = vector.broadcast %cst_25 : f32 to vector<8x128xf32>
    %37 = arith.maximumf %35, %36 : vector<8x128xf32>
    %38 = math.absf %35 : vector<8x128xf32>
    %cst_26 = arith.constant 0.000000e+00 : f32
    %39 = vector.broadcast %cst_26 : f32 to vector<8x128xf32>
    %40 = arith.subf %39, %38 : vector<8x128xf32>
    %41 = math.exp %40 : vector<8x128xf32>
    %42 = math.log1p %41 : vector<8x128xf32>
    %43 = arith.addf %37, %42 : vector<8x128xf32>
    %cst_27 = arith.constant 1.000000e+00 : f32
    %44 = vector.broadcast %cst_27 : f32 to vector<8x128xf32>
    %45 = arith.divf %44, %43 : vector<8x128xf32>
    %46 = math.log %43 : vector<8x128xf32>
    %c0_28 = arith.constant 0 : index
    %c0_29 = arith.constant 0 : index
    %47 = vector.load %arg17[%c0_28, %c0_29] : memref<8x1xf32, #tpu.memory_space<vmem>>, vector<8x1xf32>
    %cst_30 = arith.constant 0.000000e+00 : f32
    %48 = vector.broadcast %cst_30 : f32 to vector<8x1xf32>
    %49 = arith.maximumf %47, %48 : vector<8x1xf32>
    %50 = math.absf %47 : vector<8x1xf32>
    %cst_31 = arith.constant 0.000000e+00 : f32
    %51 = vector.broadcast %cst_31 : f32 to vector<8x1xf32>
    %52 = arith.subf %51, %50 : vector<8x1xf32>
    %53 = math.exp %52 : vector<8x1xf32>
    %54 = math.log1p %53 : vector<8x1xf32>
    %55 = arith.addf %49, %54 : vector<8x1xf32>
    %cst_32 = arith.constant 1.000000e+00 : f32
    %56 = vector.broadcast %cst_32 : f32 to vector<8x1xf32>
    %57 = arith.divf %56, %55 : vector<8x1xf32>
    %58 = math.log %55 : vector<8x1xf32>
    %c0_33 = arith.constant 0 : index
    %c0_34 = arith.constant 0 : index
    %c0_35 = arith.constant 0 : index
    %59 = vector.load %arg1[%c0_33, %c0_34, %c0_35] : memref<2x8x8xf32, #tpu.memory_space<vmem>>, vector<1x8x8xf32>
    %60 = vector.shape_cast %59 : vector<1x8x8xf32> to vector<8x8xf32>
    %c0_36 = arith.constant 0 : index
    %c0_37 = arith.constant 0 : index
    %c0_38 = arith.constant 0 : index
    %61 = vector.load %arg2[%c0_36, %c0_37, %c0_38] : memref<2x8x1xf32, #tpu.memory_space<vmem>>, vector<1x8x1xf32>
    %62 = vector.shape_cast %61 : vector<1x8x1xf32> to vector<8x1xf32>
    %c0_39 = arith.constant 0 : index
    %c0_40 = arith.constant 0 : index
    %c0_41 = arith.constant 0 : index
    %63 = vector.load %arg3[%c0_39, %c0_40, %c0_41] : memref<2x16x8xf32, #tpu.memory_space<vmem>>, vector<1x16x8xf32>
    %64 = vector.shape_cast %63 : vector<1x16x8xf32> to vector<16x8xf32>
    %c0_42 = arith.constant 0 : index
    %c0_43 = arith.constant 0 : index
    %c0_44 = arith.constant 0 : index
    %65 = vector.load %arg4[%c0_42, %c0_43, %c0_44] : memref<2x8x128xf32, #tpu.memory_space<vmem>>, vector<1x8x128xf32>
    %66 = vector.shape_cast %65 : vector<1x8x128xf32> to vector<8x128xf32>
    %c0_45 = arith.constant 0 : index
    %c0_46 = arith.constant 0 : index
    %c0_47 = arith.constant 0 : index
    %67 = vector.load %arg5[%c0_45, %c0_46, %c0_47] : memref<2x8x128xf32, #tpu.memory_space<vmem>>, vector<1x8x128xf32>
    %68 = vector.shape_cast %67 : vector<1x8x128xf32> to vector<8x128xf32>
    %c0_48 = arith.constant 0 : index
    %c0_49 = arith.constant 0 : index
    %c0_50 = arith.constant 0 : index
    %69 = vector.load %arg6[%c0_48, %c0_49, %c0_50] : memref<2x8x1xf32, #tpu.memory_space<vmem>>, vector<1x8x1xf32>
    %70 = vector.shape_cast %69 : vector<1x8x1xf32> to vector<8x1xf32>
    %71 = vector.shape_cast %62 : vector<8x1xf32> to vector<8x1x1xf32>
    %72 = vector.shape_cast %68 : vector<8x128xf32> to vector<1x8x128xf32>
    %73 = vector.broadcast %71 : vector<8x1x1xf32> to vector<8x8x128xf32>
    %74 = vector.broadcast %72 : vector<1x8x128xf32> to vector<8x8x128xf32>
    %75 = arith.mulf %73, %74 : vector<8x8x128xf32>
    %76 = math.exp %75 : vector<8x8x128xf32>
    %77 = vector.shape_cast %60 : vector<8x8xf32> to vector<8x8x1xf32>
    %78 = vector.shape_cast %66 : vector<8x128xf32> to vector<1x8x128xf32>
    %79 = vector.broadcast %77 : vector<8x8x1xf32> to vector<8x8x128xf32>
    %80 = vector.broadcast %78 : vector<1x8x128xf32> to vector<8x8x128xf32>
    %81 = arith.mulf %79, %80 : vector<8x8x128xf32>
    %82 = arith.mulf %81, %76 : vector<8x8x128xf32>
    %cst_51 = arith.constant dense<0.000000e+00> : vector<8x128xf32>
    %83 = vector.multi_reduction <add>, %82, %cst_51 [1] : vector<8x8x128xf32> to vector<8x128xf32>
    %84 = vector.broadcast %0 : vector<8x1xf32> to vector<8x128xf32>
    %85 = arith.mulf %84, %83 : vector<8x128xf32>
    %86 = math.log %85 : vector<8x128xf32>
    %87 = arith.mulf %1, %86 : vector<8x128xf32>
    %88 = arith.subf %87, %85 : vector<8x128xf32>
    %89 = vector.shape_cast %88 : vector<8x128xf32> to vector<1x8x128xf32>
    %cst_52 = arith.constant dense<0.000000e+00> : vector<1xf32>
    %90 = vector.multi_reduction <add>, %89, %cst_52 [1, 2] : vector<1x8x128xf32> to vector<1xf32>
    %91 = vector.shape_cast %90 : vector<1xf32> to vector<1x1x1xf32>
    %92 = vector.extract %91[0, 0, 0] : f32 from vector<1x1x1xf32>
    %93 = arith.subf %92, %6 : f32
    %94 = math.log %64 : vector<16x8xf32>
    %95 = math.log %66 : vector<8x128xf32>
    %cst_53 = arith.constant -0.699999988 : f32
    %96 = vector.broadcast %cst_53 : f32 to vector<16x8xf32>
    %97 = arith.mulf %96, %94 : vector<16x8xf32>
    %cst_54 = arith.constant -1.45698988 : f32
    %98 = vector.broadcast %cst_54 : f32 to vector<16x8xf32>
    %99 = arith.addf %98, %97 : vector<16x8xf32>
    %cst_55 = arith.constant 3.000000e-01 : f32
    %100 = vector.broadcast %cst_55 : f32 to vector<16x8xf32>
    %101 = arith.mulf %100, %64 : vector<16x8xf32>
    %102 = arith.subf %99, %101 : vector<16x8xf32>
    %103 = vector.shape_cast %102 : vector<16x8xf32> to vector<1x16x8xf32>
    %cst_56 = arith.constant dense<0.000000e+00> : vector<1xf32>
    %104 = vector.multi_reduction <add>, %103, %cst_56 [1, 2] : vector<1x16x8xf32> to vector<1xf32>
    %105 = vector.shape_cast %104 : vector<1xf32> to vector<1x1x1xf32>
    %106 = vector.extract %105[0, 0, 0] : f32 from vector<1x1x1xf32>
    %cst_57 = arith.constant -0.699999988 : f32
    %107 = vector.broadcast %cst_57 : f32 to vector<8x128xf32>
    %108 = arith.mulf %107, %95 : vector<8x128xf32>
    %cst_58 = arith.constant -1.45698988 : f32
    %109 = vector.broadcast %cst_58 : f32 to vector<8x128xf32>
    %110 = arith.addf %109, %108 : vector<8x128xf32>
    %cst_59 = arith.constant 3.000000e-01 : f32
    %111 = vector.broadcast %cst_59 : f32 to vector<8x128xf32>
    %112 = arith.mulf %111, %66 : vector<8x128xf32>
    %113 = arith.subf %110, %112 : vector<8x128xf32>
    %114 = vector.shape_cast %113 : vector<8x128xf32> to vector<1x8x128xf32>
    %cst_60 = arith.constant dense<0.000000e+00> : vector<1xf32>
    %115 = vector.multi_reduction <add>, %114, %cst_60 [1, 2] : vector<1x8x128xf32> to vector<1xf32>
    %116 = vector.shape_cast %115 : vector<1xf32> to vector<1x1x1xf32>
    %117 = vector.extract %116[0, 0, 0] : f32 from vector<1x1x1xf32>
    %118 = arith.addf %106, %117 : f32
    %cst_61 = arith.constant -5.000000e-01 : f32
    %119 = vector.broadcast %cst_61 : f32 to vector<8x128xf32>
    %120 = arith.mulf %119, %68 : vector<8x128xf32>
    %121 = arith.mulf %120, %68 : vector<8x128xf32>
    %cst_62 = arith.constant 0.918938517 : f32
    %122 = vector.broadcast %cst_62 : f32 to vector<8x128xf32>
    %123 = arith.subf %121, %122 : vector<8x128xf32>
    %124 = vector.shape_cast %123 : vector<8x128xf32> to vector<1x8x128xf32>
    %cst_63 = arith.constant dense<0.000000e+00> : vector<1xf32>
    %125 = vector.multi_reduction <add>, %124, %cst_63 [1, 2] : vector<1x8x128xf32> to vector<1xf32>
    %126 = vector.shape_cast %125 : vector<1xf32> to vector<1x1x1xf32>
    %127 = vector.extract %126[0, 0, 0] : f32 from vector<1x1x1xf32>
    %128 = arith.addf %118, %127 : f32
    %cst_64 = arith.constant -5.000000e-01 : f32
    %129 = vector.broadcast %cst_64 : f32 to vector<8x1xf32>
    %130 = arith.mulf %129, %70 : vector<8x1xf32>
    %131 = arith.mulf %130, %70 : vector<8x1xf32>
    %cst_65 = arith.constant 0.918938517 : f32
    %132 = vector.broadcast %cst_65 : f32 to vector<8x1xf32>
    %133 = arith.subf %131, %132 : vector<8x1xf32>
    %134 = vector.shape_cast %133 : vector<8x1xf32> to vector<1x8x1xf32>
    %cst_66 = arith.constant dense<0.000000e+00> : vector<1xf32>
    %135 = vector.multi_reduction <add>, %134, %cst_66 [1, 2] : vector<1x8x1xf32> to vector<1xf32>
    %136 = vector.shape_cast %135 : vector<1xf32> to vector<1x1x1xf32>
    %137 = vector.extract %136[0, 0, 0] : f32 from vector<1x1x1xf32>
    %138 = arith.addf %128, %137 : f32
    %139 = arith.subf %94, %7 : vector<16x8xf32>
    %140 = arith.mulf %139, %21 : vector<16x8xf32>
    %cst_67 = arith.constant -5.000000e-01 : f32
    %141 = vector.broadcast %cst_67 : f32 to vector<16x8xf32>
    %142 = arith.mulf %141, %140 : vector<16x8xf32>
    %143 = arith.mulf %142, %140 : vector<16x8xf32>
    %144 = arith.subf %143, %22 : vector<16x8xf32>
    %cst_68 = arith.constant 0.918938517 : f32
    %145 = vector.broadcast %cst_68 : f32 to vector<16x8xf32>
    %146 = arith.subf %144, %145 : vector<16x8xf32>
    %147 = arith.subf %146, %94 : vector<16x8xf32>
    %148 = vector.shape_cast %147 : vector<16x8xf32> to vector<1x16x8xf32>
    %cst_69 = arith.constant dense<0.000000e+00> : vector<1xf32>
    %149 = vector.multi_reduction <add>, %148, %cst_69 [1, 2] : vector<1x16x8xf32> to vector<1xf32>
    %150 = vector.shape_cast %149 : vector<1xf32> to vector<1x1x1xf32>
    %151 = vector.extract %150[0, 0, 0] : f32 from vector<1x1x1xf32>
    %152 = arith.subf %95, %8 : vector<8x128xf32>
    %153 = arith.mulf %152, %33 : vector<8x128xf32>
    %cst_70 = arith.constant -5.000000e-01 : f32
    %154 = vector.broadcast %cst_70 : f32 to vector<8x128xf32>
    %155 = arith.mulf %154, %153 : vector<8x128xf32>
    %156 = arith.mulf %155, %153 : vector<8x128xf32>
    %157 = arith.subf %156, %34 : vector<8x128xf32>
    %cst_71 = arith.constant 0.918938517 : f32
    %158 = vector.broadcast %cst_71 : f32 to vector<8x128xf32>
    %159 = arith.subf %157, %158 : vector<8x128xf32>
    %160 = arith.subf %159, %95 : vector<8x128xf32>
    %161 = vector.shape_cast %160 : vector<8x128xf32> to vector<1x8x128xf32>
    %cst_72 = arith.constant dense<0.000000e+00> : vector<1xf32>
    %162 = vector.multi_reduction <add>, %161, %cst_72 [1, 2] : vector<1x8x128xf32> to vector<1xf32>
    %163 = vector.shape_cast %162 : vector<1xf32> to vector<1x1x1xf32>
    %164 = vector.extract %163[0, 0, 0] : f32 from vector<1x1x1xf32>
    %165 = arith.addf %151, %164 : f32
    %166 = arith.subf %68, %9 : vector<8x128xf32>
    %167 = arith.mulf %166, %45 : vector<8x128xf32>
    %cst_73 = arith.constant -5.000000e-01 : f32
    %168 = vector.broadcast %cst_73 : f32 to vector<8x128xf32>
    %169 = arith.mulf %168, %167 : vector<8x128xf32>
    %170 = arith.mulf %169, %167 : vector<8x128xf32>
    %171 = arith.subf %170, %46 : vector<8x128xf32>
    %cst_74 = arith.constant 0.918938517 : f32
    %172 = vector.broadcast %cst_74 : f32 to vector<8x128xf32>
    %173 = arith.subf %171, %172 : vector<8x128xf32>
    %174 = vector.shape_cast %173 : vector<8x128xf32> to vector<1x8x128xf32>
    %cst_75 = arith.constant dense<0.000000e+00> : vector<1xf32>
    %175 = vector.multi_reduction <add>, %174, %cst_75 [1, 2] : vector<1x8x128xf32> to vector<1xf32>
    %176 = vector.shape_cast %175 : vector<1xf32> to vector<1x1x1xf32>
    %177 = vector.extract %176[0, 0, 0] : f32 from vector<1x1x1xf32>
    %178 = arith.addf %165, %177 : f32
    %179 = arith.subf %70, %10 : vector<8x1xf32>
    %180 = arith.mulf %179, %57 : vector<8x1xf32>
    %cst_76 = arith.constant -5.000000e-01 : f32
    %181 = vector.broadcast %cst_76 : f32 to vector<8x1xf32>
    %182 = arith.mulf %181, %180 : vector<8x1xf32>
    %183 = arith.mulf %182, %180 : vector<8x1xf32>
    %184 = arith.subf %183, %58 : vector<8x1xf32>
    %cst_77 = arith.constant 0.918938517 : f32
    %185 = vector.broadcast %cst_77 : f32 to vector<8x1xf32>
    %186 = arith.subf %184, %185 : vector<8x1xf32>
    %187 = vector.shape_cast %186 : vector<8x1xf32> to vector<1x8x1xf32>
    %cst_78 = arith.constant dense<0.000000e+00> : vector<1xf32>
    %188 = vector.multi_reduction <add>, %187, %cst_78 [1, 2] : vector<1x8x1xf32> to vector<1xf32>
    %189 = vector.shape_cast %188 : vector<1xf32> to vector<1x1x1xf32>
    %190 = vector.extract %189[0, 0, 0] : f32 from vector<1x1x1xf32>
    %191 = arith.addf %178, %190 : f32
    %192 = vector.broadcast %93 : f32 to vector<1x128xf32>
    %c0_79 = arith.constant 0 : index
    %c0_80 = arith.constant 0 : index
    %c0_81 = arith.constant 0 : index
    %193 = vector.load %arg18[%c0_79, %c0_80, %c0_81] : memref<1x2x128xf32, #tpu.memory_space<vmem>>, vector<1x1x128xf32>
    %194 = vector.shape_cast %193 : vector<1x1x128xf32> to vector<1x128xf32>
    %195 = vector.shape_cast %192 : vector<1x128xf32> to vector<1x1x128xf32>
    tpu.vector_store %arg18[%c0_79, %c0_80, %c0_81], %195 {strides = array<i32>} : memref<1x2x128xf32, #tpu.memory_space<vmem>>, vector<1x1x128xf32>,
    %196 = vector.broadcast %138 : f32 to vector<1x128xf32>
    %c0_82 = arith.constant 0 : index
    %c0_83 = arith.constant 0 : index
    %c0_84 = arith.constant 0 : index
    %197 = vector.load %arg19[%c0_82, %c0_83, %c0_84] : memref<1x2x128xf32, #tpu.memory_space<vmem>>, vector<1x1x128xf32>
    %198 = vector.shape_cast %197 : vector<1x1x128xf32> to vector<1x128xf32>
    %199 = vector.shape_cast %196 : vector<1x128xf32> to vector<1x1x128xf32>
    tpu.vector_store %arg19[%c0_82, %c0_83, %c0_84], %199 {strides = array<i32>} : memref<1x2x128xf32, #tpu.memory_space<vmem>>, vector<1x1x128xf32>,
    %cst_85 = arith.constant 0.000000e+00 : f32
    %200 = arith.subf %cst_85, %191 : f32
    %201 = vector.broadcast %200 : f32 to vector<1x128xf32>
    %c0_86 = arith.constant 0 : index
    %c0_87 = arith.constant 0 : index
    %c0_88 = arith.constant 0 : index
    %202 = vector.load %arg20[%c0_86, %c0_87, %c0_88] : memref<1x2x128xf32, #tpu.memory_space<vmem>>, vector<1x1x128xf32>
    %203 = vector.shape_cast %202 : vector<1x1x128xf32> to vector<1x128xf32>
    %204 = vector.shape_cast %201 : vector<1x128xf32> to vector<1x1x128xf32>
    tpu.vector_store %arg20[%c0_86, %c0_87, %c0_88], %204 {strides = array<i32>} : memref<1x2x128xf32, #tpu.memory_space<vmem>>, vector<1x1x128xf32>,
    %c1 = arith.constant 1 : index
    %c0_89 = arith.constant 0 : index
    %c0_90 = arith.constant 0 : index
    %205 = vector.load %arg1[%c1, %c0_89, %c0_90] : memref<2x8x8xf32, #tpu.memory_space<vmem>>, vector<1x8x8xf32>
    %206 = vector.shape_cast %205 : vector<1x8x8xf32> to vector<8x8xf32>
    %c1_91 = arith.constant 1 : index
    %c0_92 = arith.constant 0 : index
    %c0_93 = arith.constant 0 : index
    %207 = vector.load %arg2[%c1_91, %c0_92, %c0_93] : memref<2x8x1xf32, #tpu.memory_space<vmem>>, vector<1x8x1xf32>
    %208 = vector.shape_cast %207 : vector<1x8x1xf32> to vector<8x1xf32>
    %c1_94 = arith.constant 1 : index
    %c0_95 = arith.constant 0 : index
    %c0_96 = arith.constant 0 : index
    %209 = vector.load %arg3[%c1_94, %c0_95, %c0_96] : memref<2x16x8xf32, #tpu.memory_space<vmem>>, vector<1x16x8xf32>
    %210 = vector.shape_cast %209 : vector<1x16x8xf32> to vector<16x8xf32>
    %c1_97 = arith.constant 1 : index
    %c0_98 = arith.constant 0 : index
    %c0_99 = arith.constant 0 : index
    %211 = vector.load %arg4[%c1_97, %c0_98, %c0_99] : memref<2x8x128xf32, #tpu.memory_space<vmem>>, vector<1x8x128xf32>
    %212 = vector.shape_cast %211 : vector<1x8x128xf32> to vector<8x128xf32>
    %c1_100 = arith.constant 1 : index
    %c0_101 = arith.constant 0 : index
    %c0_102 = arith.constant 0 : index
    %213 = vector.load %arg5[%c1_100, %c0_101, %c0_102] : memref<2x8x128xf32, #tpu.memory_space<vmem>>, vector<1x8x128xf32>
    %214 = vector.shape_cast %213 : vector<1x8x128xf32> to vector<8x128xf32>
    %c1_103 = arith.constant 1 : index
    %c0_104 = arith.constant 0 : index
    %c0_105 = arith.constant 0 : index
    %215 = vector.load %arg6[%c1_103, %c0_104, %c0_105] : memref<2x8x1xf32, #tpu.memory_space<vmem>>, vector<1x8x1xf32>
    %216 = vector.shape_cast %215 : vector<1x8x1xf32> to vector<8x1xf32>
    %217 = vector.shape_cast %208 : vector<8x1xf32> to vector<8x1x1xf32>
    %218 = vector.shape_cast %214 : vector<8x128xf32> to vector<1x8x128xf32>
    %219 = vector.broadcast %217 : vector<8x1x1xf32> to vector<8x8x128xf32>
    %220 = vector.broadcast %218 : vector<1x8x128xf32> to vector<8x8x128xf32>
    %221 = arith.mulf %219, %220 : vector<8x8x128xf32>
    %222 = math.exp %221 : vector<8x8x128xf32>
    %223 = vector.shape_cast %206 : vector<8x8xf32> to vector<8x8x1xf32>
    %224 = vector.shape_cast %212 : vector<8x128xf32> to vector<1x8x128xf32>
    %225 = vector.broadcast %223 : vector<8x8x1xf32> to vector<8x8x128xf32>
    %226 = vector.broadcast %224 : vector<1x8x128xf32> to vector<8x8x128xf32>
    %227 = arith.mulf %225, %226 : vector<8x8x128xf32>
    %228 = arith.mulf %227, %222 : vector<8x8x128xf32>
    %cst_106 = arith.constant dense<0.000000e+00> : vector<8x128xf32>
    %229 = vector.multi_reduction <add>, %228, %cst_106 [1] : vector<8x8x128xf32> to vector<8x128xf32>
    %230 = vector.broadcast %0 : vector<8x1xf32> to vector<8x128xf32>
    %231 = arith.mulf %230, %229 : vector<8x128xf32>
    %232 = math.log %231 : vector<8x128xf32>
    %233 = arith.mulf %1, %232 : vector<8x128xf32>
    %234 = arith.subf %233, %231 : vector<8x128xf32>
    %235 = vector.shape_cast %234 : vector<8x128xf32> to vector<1x8x128xf32>
    %cst_107 = arith.constant dense<0.000000e+00> : vector<1xf32>
    %236 = vector.multi_reduction <add>, %235, %cst_107 [1, 2] : vector<1x8x128xf32> to vector<1xf32>
    %237 = vector.shape_cast %236 : vector<1xf32> to vector<1x1x1xf32>
    %238 = vector.extract %237[0, 0, 0] : f32 from vector<1x1x1xf32>
    %239 = arith.subf %238, %6 : f32
    %240 = math.log %210 : vector<16x8xf32>
    %241 = math.log %212 : vector<8x128xf32>
    %cst_108 = arith.constant -0.699999988 : f32
    %242 = vector.broadcast %cst_108 : f32 to vector<16x8xf32>
    %243 = arith.mulf %242, %240 : vector<16x8xf32>
    %cst_109 = arith.constant -1.45698988 : f32
    %244 = vector.broadcast %cst_109 : f32 to vector<16x8xf32>
    %245 = arith.addf %244, %243 : vector<16x8xf32>
    %cst_110 = arith.constant 3.000000e-01 : f32
    %246 = vector.broadcast %cst_110 : f32 to vector<16x8xf32>
    %247 = arith.mulf %246, %210 : vector<16x8xf32>
    %248 = arith.subf %245, %247 : vector<16x8xf32>
    %249 = vector.shape_cast %248 : vector<16x8xf32> to vector<1x16x8xf32>
    %cst_111 = arith.constant dense<0.000000e+00> : vector<1xf32>
    %250 = vector.multi_reduction <add>, %249, %cst_111 [1, 2] : vector<1x16x8xf32> to vector<1xf32>
    %251 = vector.shape_cast %250 : vector<1xf32> to vector<1x1x1xf32>
    %252 = vector.extract %251[0, 0, 0] : f32 from vector<1x1x1xf32>
    %cst_112 = arith.constant -0.699999988 : f32
    %253 = vector.broadcast %cst_112 : f32 to vector<8x128xf32>
    %254 = arith.mulf %253, %241 : vector<8x128xf32>
    %cst_113 = arith.constant -1.45698988 : f32
    %255 = vector.broadcast %cst_113 : f32 to vector<8x128xf32>
    %256 = arith.addf %255, %254 : vector<8x128xf32>
    %cst_114 = arith.constant 3.000000e-01 : f32
    %257 = vector.broadcast %cst_114 : f32 to vector<8x128xf32>
    %258 = arith.mulf %257, %212 : vector<8x128xf32>
    %259 = arith.subf %256, %258 : vector<8x128xf32>
    %260 = vector.shape_cast %259 : vector<8x128xf32> to vector<1x8x128xf32>
    %cst_115 = arith.constant dense<0.000000e+00> : vector<1xf32>
    %261 = vector.multi_reduction <add>, %260, %cst_115 [1, 2] : vector<1x8x128xf32> to vector<1xf32>
    %262 = vector.shape_cast %261 : vector<1xf32> to vector<1x1x1xf32>
    %263 = vector.extract %262[0, 0, 0] : f32 from vector<1x1x1xf32>
    %264 = arith.addf %252, %263 : f32
    %cst_116 = arith.constant -5.000000e-01 : f32
    %265 = vector.broadcast %cst_116 : f32 to vector<8x128xf32>
    %266 = arith.mulf %265, %214 : vector<8x128xf32>
    %267 = arith.mulf %266, %214 : vector<8x128xf32>
    %cst_117 = arith.constant 0.918938517 : f32
    %268 = vector.broadcast %cst_117 : f32 to vector<8x128xf32>
    %269 = arith.subf %267, %268 : vector<8x128xf32>
    %270 = vector.shape_cast %269 : vector<8x128xf32> to vector<1x8x128xf32>
    %cst_118 = arith.constant dense<0.000000e+00> : vector<1xf32>
    %271 = vector.multi_reduction <add>, %270, %cst_118 [1, 2] : vector<1x8x128xf32> to vector<1xf32>
    %272 = vector.shape_cast %271 : vector<1xf32> to vector<1x1x1xf32>
    %273 = vector.extract %272[0, 0, 0] : f32 from vector<1x1x1xf32>
    %274 = arith.addf %264, %273 : f32
    %cst_119 = arith.constant -5.000000e-01 : f32
    %275 = vector.broadcast %cst_119 : f32 to vector<8x1xf32>
    %276 = arith.mulf %275, %216 : vector<8x1xf32>
    %277 = arith.mulf %276, %216 : vector<8x1xf32>
    %cst_120 = arith.constant 0.918938517 : f32
    %278 = vector.broadcast %cst_120 : f32 to vector<8x1xf32>
    %279 = arith.subf %277, %278 : vector<8x1xf32>
    %280 = vector.shape_cast %279 : vector<8x1xf32> to vector<1x8x1xf32>
    %cst_121 = arith.constant dense<0.000000e+00> : vector<1xf32>
    %281 = vector.multi_reduction <add>, %280, %cst_121 [1, 2] : vector<1x8x1xf32> to vector<1xf32>
    %282 = vector.shape_cast %281 : vector<1xf32> to vector<1x1x1xf32>
    %283 = vector.extract %282[0, 0, 0] : f32 from vector<1x1x1xf32>
    %284 = arith.addf %274, %283 : f32
    %285 = arith.subf %240, %7 : vector<16x8xf32>
    %286 = arith.mulf %285, %21 : vector<16x8xf32>
    %cst_122 = arith.constant -5.000000e-01 : f32
    %287 = vector.broadcast %cst_122 : f32 to vector<16x8xf32>
    %288 = arith.mulf %287, %286 : vector<16x8xf32>
    %289 = arith.mulf %288, %286 : vector<16x8xf32>
    %290 = arith.subf %289, %22 : vector<16x8xf32>
    %cst_123 = arith.constant 0.918938517 : f32
    %291 = vector.broadcast %cst_123 : f32 to vector<16x8xf32>
    %292 = arith.subf %290, %291 : vector<16x8xf32>
    %293 = arith.subf %292, %240 : vector<16x8xf32>
    %294 = vector.shape_cast %293 : vector<16x8xf32> to vector<1x16x8xf32>
    %cst_124 = arith.constant dense<0.000000e+00> : vector<1xf32>
    %295 = vector.multi_reduction <add>, %294, %cst_124 [1, 2] : vector<1x16x8xf32> to vector<1xf32>
    %296 = vector.shape_cast %295 : vector<1xf32> to vector<1x1x1xf32>
    %297 = vector.extract %296[0, 0, 0] : f32 from vector<1x1x1xf32>
    %298 = arith.subf %241, %8 : vector<8x128xf32>
    %299 = arith.mulf %298, %33 : vector<8x128xf32>
    %cst_125 = arith.constant -5.000000e-01 : f32
    %300 = vector.broadcast %cst_125 : f32 to vector<8x128xf32>
    %301 = arith.mulf %300, %299 : vector<8x128xf32>
    %302 = arith.mulf %301, %299 : vector<8x128xf32>
    %303 = arith.subf %302, %34 : vector<8x128xf32>
    %cst_126 = arith.constant 0.918938517 : f32
    %304 = vector.broadcast %cst_126 : f32 to vector<8x128xf32>
    %305 = arith.subf %303, %304 : vector<8x128xf32>
    %306 = arith.subf %305, %241 : vector<8x128xf32>
    %307 = vector.shape_cast %306 : vector<8x128xf32> to vector<1x8x128xf32>
    %cst_127 = arith.constant dense<0.000000e+00> : vector<1xf32>
    %308 = vector.multi_reduction <add>, %307, %cst_127 [1, 2] : vector<1x8x128xf32> to vector<1xf32>
    %309 = vector.shape_cast %308 : vector<1xf32> to vector<1x1x1xf32>
    %310 = vector.extract %309[0, 0, 0] : f32 from vector<1x1x1xf32>
    %311 = arith.addf %297, %310 : f32
    %312 = arith.subf %214, %9 : vector<8x128xf32>
    %313 = arith.mulf %312, %45 : vector<8x128xf32>
    %cst_128 = arith.constant -5.000000e-01 : f32
    %314 = vector.broadcast %cst_128 : f32 to vector<8x128xf32>
    %315 = arith.mulf %314, %313 : vector<8x128xf32>
    %316 = arith.mulf %315, %313 : vector<8x128xf32>
    %317 = arith.subf %316, %46 : vector<8x128xf32>
    %cst_129 = arith.constant 0.918938517 : f32
    %318 = vector.broadcast %cst_129 : f32 to vector<8x128xf32>
    %319 = arith.subf %317, %318 : vector<8x128xf32>
    %320 = vector.shape_cast %319 : vector<8x128xf32> to vector<1x8x128xf32>
    %cst_130 = arith.constant dense<0.000000e+00> : vector<1xf32>
    %321 = vector.multi_reduction <add>, %320, %cst_130 [1, 2] : vector<1x8x128xf32> to vector<1xf32>
    %322 = vector.shape_cast %321 : vector<1xf32> to vector<1x1x1xf32>
    %323 = vector.extract %322[0, 0, 0] : f32 from vector<1x1x1xf32>
    %324 = arith.addf %311, %323 : f32
    %325 = arith.subf %216, %10 : vector<8x1xf32>
    %326 = arith.mulf %325, %57 : vector<8x1xf32>
    %cst_131 = arith.constant -5.000000e-01 : f32
    %327 = vector.broadcast %cst_131 : f32 to vector<8x1xf32>
    %328 = arith.mulf %327, %326 : vector<8x1xf32>
    %329 = arith.mulf %328, %326 : vector<8x1xf32>
    %330 = arith.subf %329, %58 : vector<8x1xf32>
    %cst_132 = arith.constant 0.918938517 : f32
    %331 = vector.broadcast %cst_132 : f32 to vector<8x1xf32>
    %332 = arith.subf %330, %331 : vector<8x1xf32>
    %333 = vector.shape_cast %332 : vector<8x1xf32> to vector<1x8x1xf32>
    %cst_133 = arith.constant dense<0.000000e+00> : vector<1xf32>
    %334 = vector.multi_reduction <add>, %333, %cst_133 [1, 2] : vector<1x8x1xf32> to vector<1xf32>
    %335 = vector.shape_cast %334 : vector<1xf32> to vector<1x1x1xf32>
    %336 = vector.extract %335[0, 0, 0] : f32 from vector<1x1x1xf32>
    %337 = arith.addf %324, %336 : f32
    %338 = vector.broadcast %239 : f32 to vector<1x128xf32>
    %c0_134 = arith.constant 0 : index
    %c1_135 = arith.constant 1 : index
    %c0_136 = arith.constant 0 : index
    %339 = vector.load %arg18[%c0_134, %c1_135, %c0_136] : memref<1x2x128xf32, #tpu.memory_space<vmem>>, vector<1x1x128xf32>
    %340 = vector.shape_cast %339 : vector<1x1x128xf32> to vector<1x128xf32>
    %341 = vector.shape_cast %338 : vector<1x128xf32> to vector<1x1x128xf32>
    tpu.vector_store %arg18[%c0_134, %c1_135, %c0_136], %341 {strides = array<i32>} : memref<1x2x128xf32, #tpu.memory_space<vmem>>, vector<1x1x128xf32>,
    %342 = vector.broadcast %284 : f32 to vector<1x128xf32>
    %c0_137 = arith.constant 0 : index
    %c1_138 = arith.constant 1 : index
    %c0_139 = arith.constant 0 : index
    %343 = vector.load %arg19[%c0_137, %c1_138, %c0_139] : memref<1x2x128xf32, #tpu.memory_space<vmem>>, vector<1x1x128xf32>
    %344 = vector.shape_cast %343 : vector<1x1x128xf32> to vector<1x128xf32>
    %345 = vector.shape_cast %342 : vector<1x128xf32> to vector<1x1x128xf32>
    tpu.vector_store %arg19[%c0_137, %c1_138, %c0_139], %345 {strides = array<i32>} : memref<1x2x128xf32, #tpu.memory_space<vmem>>, vector<1x1x128xf32>,
    %cst_140 = arith.constant 0.000000e+00 : f32
    %346 = arith.subf %cst_140, %337 : f32
    %347 = vector.broadcast %346 : f32 to vector<1x128xf32>
    %c0_141 = arith.constant 0 : index
    %c1_142 = arith.constant 1 : index
    %c0_143 = arith.constant 0 : index
    %348 = vector.load %arg20[%c0_141, %c1_142, %c0_143] : memref<1x2x128xf32, #tpu.memory_space<vmem>>, vector<1x1x128xf32>
    %349 = vector.shape_cast %348 : vector<1x1x128xf32> to vector<1x128xf32>
    %350 = vector.shape_cast %347 : vector<1x128xf32> to vector<1x1x128xf32>
    tpu.vector_store %arg20[%c0_141, %c1_142, %c0_143], %350 {strides = array<i32>} : memref<1x2x128xf32, #tpu.memory_space<vmem>>, vector<1x1x128xf32>,
    return
  }
  func.func @transform_0(%arg0: i32) -> (i32, i32, i32) {
    %c0_i32 = arith.constant 0 : i32
    %c0_i32_0 = arith.constant 0 : i32
    %c0_i32_1 = arith.constant 0 : i32
    return %arg0, %c0_i32, %c0_i32_0 : i32, i32, i32
  }
  func.func @transform_1(%arg0: i32) -> (i32, i32, i32) {
    %c0_i32 = arith.constant 0 : i32
    %c0_i32_0 = arith.constant 0 : i32
    %c0_i32_1 = arith.constant 0 : i32
    return %arg0, %c0_i32, %c0_i32_0 : i32, i32, i32
  }
  func.func @transform_2(%arg0: i32) -> (i32, i32, i32) {
    %c0_i32 = arith.constant 0 : i32
    %c0_i32_0 = arith.constant 0 : i32
    %c0_i32_1 = arith.constant 0 : i32
    return %arg0, %c0_i32, %c0_i32_0 : i32, i32, i32
  }
  func.func @transform_3(%arg0: i32) -> (i32, i32, i32) {
    %c0_i32 = arith.constant 0 : i32
    %c0_i32_0 = arith.constant 0 : i32
    %c0_i32_1 = arith.constant 0 : i32
    return %arg0, %c0_i32, %c0_i32_0 : i32, i32, i32
  }
  func.func @transform_4(%arg0: i32) -> (i32, i32, i32) {
    %c0_i32 = arith.constant 0 : i32
    %c0_i32_0 = arith.constant 0 : i32
    %c0_i32_1 = arith.constant 0 : i32
    return %arg0, %c0_i32, %c0_i32_0 : i32, i32, i32
  }
  func.func @transform_5(%arg0: i32) -> (i32, i32, i32) {
    %c0_i32 = arith.constant 0 : i32
    %c0_i32_0 = arith.constant 0 : i32
    %c0_i32_1 = arith.constant 0 : i32
    return %arg0, %c0_i32, %c0_i32_0 : i32, i32, i32
  }
  func.func @transform_6(%arg0: i32) -> (i32, i32) {
    %c0_i32 = arith.constant 0 : i32
    %c0_i32_0 = arith.constant 0 : i32
    %c0_i32_1 = arith.constant 0 : i32
    return %c0_i32, %c0_i32_0 : i32, i32
  }
  func.func @transform_7(%arg0: i32) -> (i32, i32) {
    %c0_i32 = arith.constant 0 : i32
    %c0_i32_0 = arith.constant 0 : i32
    %c0_i32_1 = arith.constant 0 : i32
    return %c0_i32, %c0_i32_0 : i32, i32
  }
  func.func @transform_8(%arg0: i32) -> (i32, i32) {
    %c0_i32 = arith.constant 0 : i32
    %c0_i32_0 = arith.constant 0 : i32
    %c0_i32_1 = arith.constant 0 : i32
    return %c0_i32, %c0_i32_0 : i32, i32
  }
  func.func @transform_9(%arg0: i32) -> (i32, i32) {
    %c0_i32 = arith.constant 0 : i32
    %c0_i32_0 = arith.constant 0 : i32
    %c0_i32_1 = arith.constant 0 : i32
    return %c0_i32, %c0_i32_0 : i32, i32
  }
  func.func @transform_10(%arg0: i32) -> (i32, i32) {
    %c0_i32 = arith.constant 0 : i32
    %c0_i32_0 = arith.constant 0 : i32
    %c0_i32_1 = arith.constant 0 : i32
    return %c0_i32, %c0_i32_0 : i32, i32
  }
  func.func @transform_11(%arg0: i32) -> (i32, i32) {
    %c0_i32 = arith.constant 0 : i32
    %c0_i32_0 = arith.constant 0 : i32
    %c0_i32_1 = arith.constant 0 : i32
    return %c0_i32, %c0_i32_0 : i32, i32
  }
  func.func @transform_12(%arg0: i32) -> (i32, i32) {
    %c0_i32 = arith.constant 0 : i32
    %c0_i32_0 = arith.constant 0 : i32
    %c0_i32_1 = arith.constant 0 : i32
    return %c0_i32, %c0_i32_0 : i32, i32
  }
  func.func @transform_13(%arg0: i32) -> (i32, i32) {
    %c0_i32 = arith.constant 0 : i32
    %c0_i32_0 = arith.constant 0 : i32
    %c0_i32_1 = arith.constant 0 : i32
    return %c0_i32, %c0_i32_0 : i32, i32
  }
  func.func @transform_14(%arg0: i32) -> (i32, i32) {
    %c0_i32 = arith.constant 0 : i32
    %c0_i32_0 = arith.constant 0 : i32
    %c0_i32_1 = arith.constant 0 : i32
    return %c0_i32, %c0_i32_0 : i32, i32
  }
  func.func @transform_15(%arg0: i32) -> (i32, i32) {
    %c0_i32 = arith.constant 0 : i32
    %c0_i32_0 = arith.constant 0 : i32
    %c0_i32_1 = arith.constant 0 : i32
    return %c0_i32, %c0_i32_0 : i32, i32
  }
  func.func @transform_16(%arg0: i32) -> (i32, i32) {
    %c0_i32 = arith.constant 0 : i32
    %c0_i32_0 = arith.constant 0 : i32
    %c0_i32_1 = arith.constant 0 : i32
    return %c0_i32, %c0_i32_0 : i32, i32
  }
  func.func @transform_17(%arg0: i32) -> (i32, i32, i32) {
    %c0_i32 = arith.constant 0 : i32
    %c0_i32_0 = arith.constant 0 : i32
    %c0_i32_1 = arith.constant 0 : i32
    return %arg0, %c0_i32, %c0_i32_0 : i32, i32, i32
  }
  func.func @transform_18(%arg0: i32) -> (i32, i32, i32) {
    %c0_i32 = arith.constant 0 : i32
    %c0_i32_0 = arith.constant 0 : i32
    %c0_i32_1 = arith.constant 0 : i32
    return %arg0, %c0_i32, %c0_i32_0 : i32, i32, i32
  }
  func.func @transform_19(%arg0: i32) -> (i32, i32, i32) {
    %c0_i32 = arith.constant 0 : i32
    %c0_i32_0 = arith.constant 0 : i32
    %c0_i32_1 = arith.constant 0 : i32
    return %arg0, %c0_i32, %c0_i32_0 : i32, i32, i32
  }
}

</mosaic_0001>

<llo_original>
// kernel: tbip_forward_pallas.1
$region0: #{tbip_forward_pallas.1}
  #allocation0 [shape = 'u32[]', space=smem, size = 0x4, offset = 0x4, fixed_abs, tag = 'smem constant byte address 0x4 - core index']
  #allocation1 [shape = 'u32[144,128]{1,0:T(1,128)}', space=vmem, size = 0x12000, scoped, tag = 'internal scratch']
  %s0 = inlined_call_operand.vmem [shape: f32[4,8,8], index: 0, kind: input, shape index: {}]
  %s1 = inlined_call_operand.vmem [shape: f32[4,8,1], index: 1, kind: input, shape index: {}]
  %s2 = inlined_call_operand.vmem [shape: f32[4,16,8], index: 2, kind: input, shape index: {}]
  %s3 = inlined_call_operand.vmem [shape: f32[4,8,128], index: 3, kind: input, shape index: {}]
  %s4 = inlined_call_operand.vmem [shape: f32[4,8,128], index: 4, kind: input, shape index: {}]
  %s5 = inlined_call_operand.vmem [shape: f32[4,8,1], index: 5, kind: input, shape index: {}]
  %s6 = inlined_call_operand.vmem [shape: f32[8,1], index: 6, kind: input, shape index: {}]
  %s7 = inlined_call_operand.vmem [shape: f32[8,128], index: 7, kind: input, shape index: {}]
  %s8 = inlined_call_operand.vmem [shape: f32[8,128], index: 8, kind: input, shape index: {}]
  %s9 = inlined_call_operand.vmem [shape: f32[16,8], index: 9, kind: input, shape index: {}]
  %s10 = inlined_call_operand.vmem [shape: f32[16,8], index: 10, kind: input, shape index: {}]
  %s11 = inlined_call_operand.vmem [shape: f32[8,128], index: 11, kind: input, shape index: {}]
  %s12 = inlined_call_operand.vmem [shape: f32[8,128], index: 12, kind: input, shape index: {}]
  %s13 = inlined_call_operand.vmem [shape: f32[8,128], index: 13, kind: input, shape index: {}]
  %s14 = inlined_call_operand.vmem [shape: f32[8,128], index: 14, kind: input, shape index: {}]
  %s15 = inlined_call_operand.vmem [shape: f32[8,1], index: 15, kind: input, shape index: {}]
  %s16 = inlined_call_operand.vmem [shape: f32[8,1], index: 16, kind: input, shape index: {}]
  %s17 = inlined_call_operand.vmem [shape: f32[2,2,128], index: 17, kind: output, shape index: {0}]
  %s18 = inlined_call_operand.vmem [shape: f32[2,2,128], index: 18, kind: output, shape index: {1}]
  %s19 = inlined_call_operand.vmem [shape: f32[2,2,128], index: 19, kind: output, shape index: {2}]
  %20 = xla_tuple %s17, %s18, %s19
  %s21 = sld [smem:[#allocation0]]
  $region117: #{tbip_forward_pallas.1} parent=0
    _
  %s23 = ssub.s32 1, %s21
  %s24 = scalar_select 0, %s23, %s21
  loop: start=0, step=1, limit=4
  $region2: #{tbip_forward_pallas.1} parent=0 // loop_pre_header
    _
  $region3: #{tbip_forward_pallas.1} parent=0 // loop_header
    %s26 = sphi 0, %s30
    %p27 = scmp.ge.s32.totalorder %s26, 4
    %s36 = sphi 0, %s38
    %s39 = sphi 0, %s36
    %s40 = sphi 0, %s39
    %s56 = sphi 0, %s40
    %s62 = sphi 0, %s64
    %s65 = sphi 0, %s62
    %s66 = sphi 0, %s65
    %s82 = sphi 0, %s66
    %s88 = sphi 0, %s90
    %s91 = sphi 0, %s88
    %s92 = sphi 0, %s91
    %s108 = sphi 0, %s92
    %s114 = sphi 0, %s116
    %s117 = sphi 0, %s114
    %s118 = sphi 0, %s117
    %s134 = sphi 0, %s118
    %s140 = sphi 0, %s142
    %s143 = sphi 0, %s140
    %s144 = sphi 0, %s143
    %s160 = sphi 0, %s144
    %s166 = sphi 0, %s168
    %s169 = sphi 0, %s166
    %s170 = sphi 0, %s169
    %s186 = sphi 0, %s170
    %s190 = sphi 0, %s190
    %s192 = sphi 0, %s190
    %s193 = sphi 0, %s192
    %s207 = sphi 0, %s193
    %s211 = sphi 0, %s211
    %s213 = sphi 0, %s211
    %s214 = sphi 0, %s213
    %s228 = sphi 0, %s214
    %s232 = sphi 0, %s232
    %s234 = sphi 0, %s232
    %s235 = sphi 0, %s234
    %s249 = sphi 0, %s235
    %s253 = sphi 0, %s253
    %s255 = sphi 0, %s253
    %s256 = sphi 0, %s255
    %s270 = sphi 0, %s256
    %s274 = sphi 0, %s274
    %s276 = sphi 0, %s274
    %s277 = sphi 0, %s276
    %s291 = sphi 0, %s277
    %s295 = sphi 0, %s295
    %s297 = sphi 0, %s295
    %s298 = sphi 0, %s297
    %s312 = sphi 0, %s298
    %s316 = sphi 0, %s316
    %s318 = sphi 0, %s316
    %s319 = sphi 0, %s318
    %s333 = sphi 0, %s319
    %s337 = sphi 0, %s337
    %s339 = sphi 0, %s337
    %s340 = sphi 0, %s339
    %s354 = sphi 0, %s340
    %s358 = sphi 0, %s358
    %s360 = sphi 0, %s358
    %s361 = sphi 0, %s360
    %s375 = sphi 0, %s361
    %s379 = sphi 0, %s379
    %s381 = sphi 0, %s379
    %s382 = sphi 0, %s381
    %s396 = sphi 0, %s382
    %s400 = sphi 0, %s400
    %s402 = sphi 0, %s400
    %s403 = sphi 0, %s402
    %s417 = sphi 0, %s403
    %s423 = sphi 0, %s425
    %s426 = sphi 0, %s423
    %s427 = sphi 0, %s426
    %s443 = sphi 0, %s427
    %s449 = sphi 0, %s451
    %s452 = sphi 0, %s449
    %s453 = sphi 0, %s452
    %s469 = sphi 0, %s453
    %s475 = sphi 0, %s477
    %s478 = sphi 0, %s475
    %s479 = sphi 0, %s478
    %s495 = sphi 0, %s479
  $region4: #{tbip_forward_pallas.1} parent=0 // loop_header_branch
    %29 = sbr.rel (%p27) target = $region8
  $region5: #{tbip_forward_pallas.1} parent=0 // loop_body
    %s31 = ssub.s32 %s26, 1
    %s32 = ssub.s32 %s26, 2
    %s33 = sadd.s32 %s26, 1
    %s34 = ssub.s32 %s26, %s33
    %p35 = scmp.eq.s32.totalorder %s34, 0
    %s37 = sadd.s32 %s36, 1
    %s38 = scalar_select %p35, %s36, %s37
    %p41 = pneg %p35
    %p42 = scmp.eq.s32.totalorder %s26, 1
    %p43 = por %p41, %p42
    %p44 = scmp.ne.s32.totalorder %s36, %s39
    %p45 = scmp.eq.s32.totalorder %s26, 0
    %p46 = por %p44, %p45
    %p47 = scmp.ne.s32.totalorder %s36, %s39
    %p48 = scmp.eq.s32.totalorder %s31, 1
    %p49 = por %p47, %p48
    %p50 = scmp.ne.s32.totalorder %s39, %s40
    %p51 = scmp.eq.s32.totalorder %s31, 0
    %p52 = por %p50, %p51
    %p53 = scmp.ne.s32.totalorder %s39, %s40
    %p54 = scmp.eq.s32.totalorder %s32, 1
    %p55 = por %p53, %p54
    %p57 = scmp.ne.s32.totalorder %s40, %s56
    %p58 = scmp.eq.s32.totalorder %s32, 0
    %p59 = por %p57, %p58
    %s60 = ssub.s32 %s26, %s33
    %p61 = scmp.eq.s32.totalorder %s60, 0
    %s63 = sadd.s32 %s62, 1
    %s64 = scalar_select %p61, %s62, %s63
    %p67 = pneg %p61
    %p68 = scmp.eq.s32.totalorder %s26, 1
    %p69 = por %p67, %p68
    %p70 = scmp.ne.s32.totalorder %s62, %s65
    %p71 = scmp.eq.s32.totalorder %s26, 0
    %p72 = por %p70, %p71
    %p73 = scmp.ne.s32.totalorder %s62, %s65
    %p74 = scmp.eq.s32.totalorder %s31, 1
    %p75 = por %p73, %p74
    %p76 = scmp.ne.s32.totalorder %s65, %s66
    %p77 = scmp.eq.s32.totalorder %s31, 0
    %p78 = por %p76, %p77
    %p79 = scmp.ne.s32.totalorder %s65, %s66
    %p80 = scmp.eq.s32.totalorder %s32, 1
    %p81 = por %p79, %p80
    %p83 = scmp.ne.s32.totalorder %s66, %s82
    %p84 = scmp.eq.s32.totalorder %s32, 0
    %p85 = por %p83, %p84
    %s86 = ssub.s32 %s26, %s33
    %p87 = scmp.eq.s32.totalorder %s86, 0
    %s89 = sadd.s32 %s88, 1
    %s90 = scalar_select %p87, %s88, %s89
    %p93 = pneg %p87
    %p94 = scmp.eq.s32.totalorder %s26, 1
    %p95 = por %p93, %p94
    %p96 = scmp.ne.s32.totalorder %s88, %s91
    %p97 = scmp.eq.s32.totalorder %s26, 0
    %p98 = por %p96, %p97
    %p99 = scmp.ne.s32.totalorder %s88, %s91
    %p100 = scmp.eq.s32.totalorder %s31, 1
    %p101 = por %p99, %p100
    %p102 = scmp.ne.s32.totalorder %s91, %s92
    %p103 = scmp.eq.s32.totalorder %s31, 0
    %p104 = por %p102, %p103
    %p105 = scmp.ne.s32.totalorder %s91, %s92
    %p106 = scmp.eq.s32.totalorder %s32, 1
    %p107 = por %p105, %p106
    %p109 = scmp.ne.s32.totalorder %s92, %s108
    %p110 = scmp.eq.s32.totalorder %s32, 0
    %p111 = por %p109, %p110
    %s112 = ssub.s32 %s26, %s33
    %p113 = scmp.eq.s32.totalorder %s112, 0
    %s115 = sadd.s32 %s114, 1
    %s116 = scalar_select %p113, %s114, %s115
    %p119 = pneg %p113
    %p120 = scmp.eq.s32.totalorder %s26, 1
    %p121 = por %p119, %p120
    %p122 = scmp.ne.s32.totalorder %s114, %s117
    %p123 = scmp.eq.s32.totalorder %s26, 0
    %p124 = por %p122, %p123
    %p125 = scmp.ne.s32.totalorder %s114, %s117
    %p126 = scmp.eq.s32.totalorder %s31, 1
    %p127 = por %p125, %p126
    %p128 = scmp.ne.s32.totalorder %s117, %s118
    %p129 = scmp.eq.s32.totalorder %s31, 0
    %p130 = por %p128, %p129
    %p131 = scmp.ne.s32.totalorder %s117, %s118
    %p132 = scmp.eq.s32.totalorder %s32, 1
    %p133 = por %p131, %p132
    %p135 = scmp.ne.s32.totalorder %s118, %s134
    %p136 = scmp.eq.s32.totalorder %s32, 0
    %p137 = por %p135, %p136
    %s138 = ssub.s32 %s26, %s33
    %p139 = scmp.eq.s32.totalorder %s138, 0
    %s141 = sadd.s32 %s140, 1
    %s142 = scalar_select %p139, %s140, %s141
    %p145 = pneg %p139
    %p146 = scmp.eq.s32.totalorder %s26, 1
    %p147 = por %p145, %p146
    %p148 = scmp.ne.s32.totalorder %s140, %s143
    %p149 = scmp.eq.s32.totalorder %s26, 0
    %p150 = por %p148, %p149
    %p151 = scmp.ne.s32.totalorder %s140, %s143
    %p152 = scmp.eq.s32.totalorder %s31, 1
    %p153 = por %p151, %p152
    %p154 = scmp.ne.s32.totalorder %s143, %s144
    %p155 = scmp.eq.s32.totalorder %s31, 0
    %p156 = por %p154, %p155
    %p157 = scmp.ne.s32.totalorder %s143, %s144
    %p158 = scmp.eq.s32.totalorder %s32, 1
    %p159 = por %p157, %p158
    %p161 = scmp.ne.s32.totalorder %s144, %s160
    %p162 = scmp.eq.s32.totalorder %s32, 0
    %p163 = por %p161, %p162
    %s164 = ssub.s32 %s26, %s33
    %p165 = scmp.eq.s32.totalorder %s164, 0
    %s167 = sadd.s32 %s166, 1
    %s168 = scalar_select %p165, %s166, %s167
    %p171 = pneg %p165
    %p172 = scmp.eq.s32.totalorder %s26, 1
    %p173 = por %p171, %p172
    %p174 = scmp.ne.s32.totalorder %s166, %s169
    %p175 = scmp.eq.s32.totalorder %s26, 0
    %p176 = por %p174, %p175
    %p177 = scmp.ne.s32.totalorder %s166, %s169
    %p178 = scmp.eq.s32.totalorder %s31, 1
    %p179 = por %p177, %p178
    %p180 = scmp.ne.s32.totalorder %s169, %s170
    %p181 = scmp.eq.s32.totalorder %s31, 0
    %p182 = por %p180, %p181
    %p183 = scmp.ne.s32.totalorder %s169, %s170
    %p184 = scmp.eq.s32.totalorder %s32, 1
    %p185 = por %p183, %p184
    %p187 = scmp.ne.s32.totalorder %s170, %s186
    %p188 = scmp.eq.s32.totalorder %s32, 0
    %p189 = por %p187, %p188
    %s191 = sadd.s32 %s190, 1
    %p194 = scmp.eq.s32.totalorder %s26, 1
    %p195 = scmp.ne.s32.totalorder %s190, %s192
    %p196 = scmp.eq.s32.totalorder %s26, 0
    %p197 = por %p195, %p196
    %p198 = scmp.ne.s32.totalorder %s190, %s192
    %p199 = scmp.eq.s32.totalorder %s31, 1
    %p200 = por %p198, %p199
    %p201 = scmp.ne.s32.totalorder %s192, %s193
    %p202 = scmp.eq.s32.totalorder %s31, 0
    %p203 = por %p201, %p202
    %p204 = scmp.ne.s32.totalorder %s192, %s193
    %p205 = scmp.eq.s32.totalorder %s32, 1
    %p206 = por %p204, %p205
    %p208 = scmp.ne.s32.totalorder %s193, %s207
    %p209 = scmp.eq.s32.totalorder %s32, 0
    %p210 = por %p208, %p209
    %s212 = sadd.s32 %s211, 1
    %p215 = scmp.eq.s32.totalorder %s26, 1
    %p216 = scmp.ne.s32.totalorder %s211, %s213
    %p217 = scmp.eq.s32.totalorder %s26, 0
    %p218 = por %p216, %p217
    %p219 = scmp.ne.s32.totalorder %s211, %s213
    %p220 = scmp.eq.s32.totalorder %s31, 1
    %p221 = por %p219, %p220
    %p222 = scmp.ne.s32.totalorder %s213, %s214
    %p223 = scmp.eq.s32.totalorder %s31, 0
    %p224 = por %p222, %p223
    %p225 = scmp.ne.s32.totalorder %s213, %s214
    %p226 = scmp.eq.s32.totalorder %s32, 1
    %p227 = por %p225, %p226
    %p229 = scmp.ne.s32.totalorder %s214, %s228
    %p230 = scmp.eq.s32.totalorder %s32, 0
    %p231 = por %p229, %p230
    %s233 = sadd.s32 %s232, 1
    %p236 = scmp.eq.s32.totalorder %s26, 1
    %p237 = scmp.ne.s32.totalorder %s232, %s234
    %p238 = scmp.eq.s32.totalorder %s26, 0
    %p239 = por %p237, %p238
    %p240 = scmp.ne.s32.totalorder %s232, %s234
    %p241 = scmp.eq.s32.totalorder %s31, 1
    %p242 = por %p240, %p241
    %p243 = scmp.ne.s32.totalorder %s234, %s235
    %p244 = scmp.eq.s32.totalorder %s31, 0
    %p245 = por %p243, %p244
    %p246 = scmp.ne.s32.totalorder %s234, %s235
    %p247 = scmp.eq.s32.totalorder %s32, 1
    %p248 = por %p246, %p247
    %p250 = scmp.ne.s32.totalorder %s235, %s249
    %p251 = scmp.eq.s32.totalorder %s32, 0
    %p252 = por %p250, %p251
    %s254 = sadd.s32 %s253, 1
    %p257 = scmp.eq.s32.totalorder %s26, 1
    %p258 = scmp.ne.s32.totalorder %s253, %s255
    %p259 = scmp.eq.s32.totalorder %s26, 0
    %p260 = por %p258, %p259
    %p261 = scmp.ne.s32.totalorder %s253, %s255
    %p262 = scmp.eq.s32.totalorder %s31, 1
    %p263 = por %p261, %p262
    %p264 = scmp.ne.s32.totalorder %s255, %s256
    %p265 = scmp.eq.s32.totalorder %s31, 0
    %p266 = por %p264, %p265
    %p267 = scmp.ne.s32.totalorder %s255, %s256
    %p268 = scmp.eq.s32.totalorder %s32, 1
    %p269 = por %p267, %p268
    %p271 = scmp.ne.s32.totalorder %s256, %s270
    %p272 = scmp.eq.s32.totalorder %s32, 0
    %p273 = por %p271, %p272
    %s275 = sadd.s32 %s274, 1
    %p278 = scmp.eq.s32.totalorder %s26, 1
    %p279 = scmp.ne.s32.totalorder %s274, %s276
    %p280 = scmp.eq.s32.totalorder %s26, 0
    %p281 = por %p279, %p280
    %p282 = scmp.ne.s32.totalorder %s274, %s276
    %p283 = scmp.eq.s32.totalorder %s31, 1
    %p284 = por %p282, %p283
    %p285 = scmp.ne.s32.totalorder %s276, %s277
    %p286 = scmp.eq.s32.totalorder %s31, 0
    %p287 = por %p285, %p286
    %p288 = scmp.ne.s32.totalorder %s276, %s277
    %p289 = scmp.eq.s32.totalorder %s32, 1
    %p290 = por %p288, %p289
    %p292 = scmp.ne.s32.totalorder %s277, %s291
    %p293 = scmp.eq.s32.totalorder %s32, 0
    %p294 = por %p292, %p293
    %s296 = sadd.s32 %s295, 1
    %p299 = scmp.eq.s32.totalorder %s26, 1
    %p300 = scmp.ne.s32.totalorder %s295, %s297
    %p301 = scmp.eq.s32.totalorder %s26, 0
    %p302 = por %p300, %p301
    %p303 = scmp.ne.s32.totalorder %s295, %s297
    %p304 = scmp.eq.s32.totalorder %s31, 1
    %p305 = por %p303, %p304
    %p306 = scmp.ne.s32.totalorder %s297, %s298
    %p307 = scmp.eq.s32.totalorder %s31, 0
    %p308 = por %p306, %p307
    %p309 = scmp.ne.s32.totalorder %s297, %s298
    %p310 = scmp.eq.s32.totalorder %s32, 1
    %p311 = por %p309, %p310
    %p313 = scmp.ne.s32.totalorder %s298, %s312
    %p314 = scmp.eq.s32.totalorder %s32, 0
    %p315 = por %p313, %p314
    %s317 = sadd.s32 %s316, 1
    %p320 = scmp.eq.s32.totalorder %s26, 1
    %p321 = scmp.ne.s32.totalorder %s316, %s318
    %p322 = scmp.eq.s32.totalorder %s26, 0
    %p323 = por %p321, %p322
    %p324 = scmp.ne.s32.totalorder %s316, %s318
    %p325 = scmp.eq.s32.totalorder %s31, 1
    %p326 = por %p324, %p325
    %p327 = scmp.ne.s32.totalorder %s318, %s319
    %p328 = scmp.eq.s32.totalorder %s31, 0
    %p329 = por %p327, %p328
    %p330 = scmp.ne.s32.totalorder %s318, %s319
    %p331 = scmp.eq.s32.totalorder %s32, 1
    %p332 = por %p330, %p331
    %p334 = scmp.ne.s32.totalorder %s319, %s333
    %p335 = scmp.eq.s32.totalorder %s32, 0
    %p336 = por %p334, %p335
    %s338 = sadd.s32 %s337, 1
    %p341 = scmp.eq.s32.totalorder %s26, 1
    %p342 = scmp.ne.s32.totalorder %s337, %s339
    %p343 = scmp.eq.s32.totalorder %s26, 0
    %p344 = por %p342, %p343
    %p345 = scmp.ne.s32.totalorder %s337, %s339
    %p346 = scmp.eq.s32.totalorder %s31, 1
    %p347 = por %p345, %p346
    %p348 = scmp.ne.s32.totalorder %s339, %s340
    %p349 = scmp.eq.s32.totalorder %s31, 0
    %p350 = por %p348, %p349
    %p351 = scmp.ne.s32.totalorder %s339, %s340
    %p352 = scmp.eq.s32.totalorder %s32, 1
    %p353 = por %p351, %p352
    %p355 = scmp.ne.s32.totalorder %s340, %s354
    %p356 = scmp.eq.s32.totalorder %s32, 0
    %p357 = por %p355, %p356
    %s359 = sadd.s32 %s358, 1
    %p362 = scmp.eq.s32.totalorder %s26, 1
    %p363 = scmp.ne.s32.totalorder %s358, %s360
    %p364 = scmp.eq.s32.totalorder %s26, 0
    %p365 = por %p363, %p364
    %p366 = scmp.ne.s32.totalorder %s358, %s360
    %p367 = scmp.eq.s32.totalorder %s31, 1
    %p368 = por %p366, %p367
    %p369 = scmp.ne.s32.totalorder %s360, %s361
    %p370 = scmp.eq.s32.totalorder %s31, 0
    %p371 = por %p369, %p370
    %p372 = scmp.ne.s32.totalorder %s360, %s361
    %p373 = scmp.eq.s32.totalorder %s32, 1
    %p374 = por %p372, %p373
    %p376 = scmp.ne.s32.totalorder %s361, %s375
    %p377 = scmp.eq.s32.totalorder %s32, 0
    %p378 = por %p376, %p377
    %s380 = sadd.s32 %s379, 1
    %p383 = scmp.eq.s32.totalorder %s26, 1
    %p384 = scmp.ne.s32.totalorder %s379, %s381
    %p385 = scmp.eq.s32.totalorder %s26, 0
    %p386 = por %p384, %p385
    %p387 = scmp.ne.s32.totalorder %s379, %s381
    %p388 = scmp.eq.s32.totalorder %s31, 1
    %p389 = por %p387, %p388
    %p390 = scmp.ne.s32.totalorder %s381, %s382
    %p391 = scmp.eq.s32.totalorder %s31, 0
    %p392 = por %p390, %p391
    %p393 = scmp.ne.s32.totalorder %s381, %s382
    %p394 = scmp.eq.s32.totalorder %s32, 1
    %p395 = por %p393, %p394
    %p397 = scmp.ne.s32.totalorder %s382, %s396
    %p398 = scmp.eq.s32.totalorder %s32, 0
    %p399 = por %p397, %p398
    %s401 = sadd.s32 %s400, 1
    %p404 = scmp.eq.s32.totalorder %s26, 1
    %p405 = scmp.ne.s32.totalorder %s400, %s402
    %p406 = scmp.eq.s32.totalorder %s26, 0
    %p407 = por %p405, %p406
    %p408 = scmp.ne.s32.totalorder %s400, %s402
    %p409 = scmp.eq.s32.totalorder %s31, 1
    %p410 = por %p408, %p409
    %p411 = scmp.ne.s32.totalorder %s402, %s403
    %p412 = scmp.eq.s32.totalorder %s31, 0
    %p413 = por %p411, %p412
    %p414 = scmp.ne.s32.totalorder %s402, %s403
    %p415 = scmp.eq.s32.totalorder %s32, 1
    %p416 = por %p414, %p415
    %p418 = scmp.ne.s32.totalorder %s403, %s417
    %p419 = scmp.eq.s32.totalorder %s32, 0
    %p420 = por %p418, %p419
    %s421 = ssub.s32 %s26, %s33
    %p422 = scmp.eq.s32.totalorder %s421, 0
    %s424 = sadd.s32 %s423, 1
    %s425 = scalar_select %p422, %s423, %s424
    %p428 = pneg %p422
    %p429 = scmp.eq.s32.totalorder %s26, 1
    %p430 = por %p428, %p429
    %p431 = scmp.ne.s32.totalorder %s423, %s426
    %p432 = scmp.eq.s32.totalorder %s26, 0
    %p433 = por %p431, %p432
    %p434 = scmp.ne.s32.totalorder %s423, %s426
    %p435 = scmp.eq.s32.totalorder %s31, 1
    %p436 = por %p434, %p435
    %p437 = scmp.ne.s32.totalorder %s426, %s427
    %p438 = scmp.eq.s32.totalorder %s31, 0
    %p439 = por %p437, %p438
    %p440 = scmp.ne.s32.totalorder %s426, %s427
    %p441 = scmp.eq.s32.totalorder %s32, 1
    %p442 = por %p440, %p441
    %p444 = scmp.ne.s32.totalorder %s427, %s443
    %p445 = scmp.eq.s32.totalorder %s32, 0
    %p446 = por %p444, %p445
    %s447 = ssub.s32 %s26, %s33
    %p448 = scmp.eq.s32.totalorder %s447, 0
    %s450 = sadd.s32 %s449, 1
    %s451 = scalar_select %p448, %s449, %s450
    %p454 = pneg %p448
    %p455 = scmp.eq.s32.totalorder %s26, 1
    %p456 = por %p454, %p455
    %p457 = scmp.ne.s32.totalorder %s449, %s452
    %p458 = scmp.eq.s32.totalorder %s26, 0
    %p459 = por %p457, %p458
    %p460 = scmp.ne.s32.totalorder %s449, %s452
    %p461 = scmp.eq.s32.totalorder %s31, 1
    %p462 = por %p460, %p461
    %p463 = scmp.ne.s32.totalorder %s452, %s453
    %p464 = scmp.eq.s32.totalorder %s31, 0
    %p465 = por %p463, %p464
    %p466 = scmp.ne.s32.totalorder %s452, %s453
    %p467 = scmp.eq.s32.totalorder %s32, 1
    %p468 = por %p466, %p467
    %p470 = scmp.ne.s32.totalorder %s453, %s469
    %p471 = scmp.eq.s32.totalorder %s32, 0
    %p472 = por %p470, %p471
    %s473 = ssub.s32 %s26, %s33
    %p474 = scmp.eq.s32.totalorder %s473, 0
    %s476 = sadd.s32 %s475, 1
    %s477 = scalar_select %p474, %s475, %s476
    %p480 = pneg %p474
    %p481 = scmp.eq.s32.totalorder %s26, 1
    %p482 = por %p480, %p481
    %p483 = scmp.ne.s32.totalorder %s475, %s478
    %p484 = scmp.eq.s32.totalorder %s26, 0
    %p485 = por %p483, %p484
    %p486 = scmp.ne.s32.totalorder %s475, %s478
    %p487 = scmp.eq.s32.totalorder %s31, 1
    %p488 = por %p486, %p487
    %p489 = scmp.ne.s32.totalorder %s478, %s479
    %p490 = scmp.eq.s32.totalorder %s31, 0
    %p491 = por %p489, %p490
    %p492 = scmp.ne.s32.totalorder %s478, %s479
    %p493 = scmp.eq.s32.totalorder %s32, 1
    %p494 = por %p492, %p493
    %p496 = scmp.ne.s32.totalorder %s479, %s495
    %p497 = scmp.eq.s32.totalorder %s32, 0
    %p498 = por %p496, %p497
    %p499 = scmp.le.s32.totalorder 1, %s26
    %p500 = scmp.lt.s32.totalorder %s26, 3
    %p501 = pnand %p499, %p500
    %p502 = pneg %p501
    // Predicated region
    $region9: #{tbip_forward_pallas.1} parent=5 // pred_check
      _
    $region10: #{tbip_forward_pallas.1} parent=5 // pred_check_branch
      %504 = sbr.rel (%p501) target = $region12
    $region11: #{tbip_forward_pallas.1} parent=5 // pred_region
      %s505 = ssub.s32 %s26, 1
      // Predicated region
      $region13: #{tbip_forward_pallas.1} parent=11 // pred_check
        %p506 = pneg %p203
      $region14: #{tbip_forward_pallas.1} parent=11 // pred_check_branch
        %508 = sbr.rel (%p506) target = $region16
      $region15: #{tbip_forward_pallas.1} parent=11 // pred_region
        _
      $region16: #{tbip_forward_pallas.1} parent=11 // pred_fallthru
        _
      // Predicated region
      $region17: #{tbip_forward_pallas.1} parent=11 // pred_check
        %p509 = pneg %p224
      $region18: #{tbip_forward_pallas.1} parent=11 // pred_check_branch
        %511 = sbr.rel (%p509) target = $region20
      $region19: #{tbip_forward_pallas.1} parent=11 // pred_region
        _
      $region20: #{tbip_forward_pallas.1} parent=11 // pred_fallthru
        _
      // Predicated region
      $region21: #{tbip_forward_pallas.1} parent=11 // pred_check
        %p512 = pneg %p245
      $region22: #{tbip_forward_pallas.1} parent=11 // pred_check_branch
        %514 = sbr.rel (%p512) target = $region24
      $region23: #{tbip_forward_pallas.1} parent=11 // pred_region
        _
      $region24: #{tbip_forward_pallas.1} parent=11 // pred_fallthru
        _
      // Predicated region
      $region25: #{tbip_forward_pallas.1} parent=11 // pred_check
        %p515 = pneg %p266
      $region26: #{tbip_forward_pallas.1} parent=11 // pred_check_branch
        %517 = sbr.rel (%p515) target = $region28
      $region27: #{tbip_forward_pallas.1} parent=11 // pred_region
        _
      $region28: #{tbip_forward_pallas.1} parent=11 // pred_fallthru
        _
      // Predicated region
      $region29: #{tbip_forward_pallas.1} parent=11 // pred_check
        %p518 = pneg %p287
      $region30: #{tbip_forward_pallas.1} parent=11 // pred_check_branch
        %520 = sbr.rel (%p518) target = $region32
      $region31: #{tbip_forward_pallas.1} parent=11 // pred_region
        _
      $region32: #{tbip_forward_pallas.1} parent=11 // pred_fallthru
        _
      // Predicated region
      $region33: #{tbip_forward_pallas.1} parent=11 // pred_check
        %p521 = pneg %p308
      $region34: #{tbip_forward_pallas.1} parent=11 // pred_check_branch
        %523 = sbr.rel (%p521) target = $region36
      $region35: #{tbip_forward_pallas.1} parent=11 // pred_region
        _
      $region36: #{tbip_forward_pallas.1} parent=11 // pred_fallthru
        _
      // Predicated region
      $region37: #{tbip_forward_pallas.1} parent=11 // pred_check
        %p524 = pneg %p329
      $region38: #{tbip_forward_pallas.1} parent=11 // pred_check_branch
        %526 = sbr.rel (%p524) target = $region40
      $region39: #{tbip_forward_pallas.1} parent=11 // pred_region
        _
      $region40: #{tbip_forward_pallas.1} parent=11 // pred_fallthru
        _
      // Predicated region
      $region41: #{tbip_forward_pallas.1} parent=11 // pred_check
        %p527 = pneg %p350
      $region42: #{tbip_forward_pallas.1} parent=11 // pred_check_branch
        %529 = sbr.rel (%p527) target = $region44
      $region43: #{tbip_forward_pallas.1} parent=11 // pred_region
        _
      $region44: #{tbip_forward_pallas.1} parent=11 // pred_fallthru
        _
      // Predicated region
      $region45: #{tbip_forward_pallas.1} parent=11 // pred_check
        %p530 = pneg %p371
      $region46: #{tbip_forward_pallas.1} parent=11 // pred_check_branch
        %532 = sbr.rel (%p530) target = $region48
      $region47: #{tbip_forward_pallas.1} parent=11 // pred_region
        _
      $region48: #{tbip_forward_pallas.1} parent=11 // pred_fallthru
        _
      // Predicated region
      $region49: #{tbip_forward_pallas.1} parent=11 // pred_check
        %p533 = pneg %p392
      $region50: #{tbip_forward_pallas.1} parent=11 // pred_check_branch
        %535 = sbr.rel (%p533) target = $region52
      $region51: #{tbip_forward_pallas.1} parent=11 // pred_region
        _
      $region52: #{tbip_forward_pallas.1} parent=11 // pred_fallthru
        _
      // Predicated region
      $region53: #{tbip_forward_pallas.1} parent=11 // pred_check
        %p536 = pneg %p413
      $region54: #{tbip_forward_pallas.1} parent=11 // pred_check_branch
        %538 = sbr.rel (%p536) target = $region56
      $region55: #{tbip_forward_pallas.1} parent=11 // pred_region
        _
      $region56: #{tbip_forward_pallas.1} parent=11 // pred_fallthru
        _
    $region12: #{tbip_forward_pallas.1} parent=5 // pred_fallthru
      _
    %p539 = scmp.lt.s32.totalorder %s26, 2
    // Predicated region
    $region57: #{tbip_forward_pallas.1} parent=5 // pred_check
      %p540 = pneg %p539
    $region58: #{tbip_forward_pallas.1} parent=5 // pred_check_branch
      %542 = sbr.rel (%p540) target = $region60
    $region59: #{tbip_forward_pallas.1} parent=5 // pred_region
      // Predicated region
      $region61: #{tbip_forward_pallas.1} parent=59 // pred_check
        %p543 = pneg %p46
      $region62: #{tbip_forward_pallas.1} parent=59 // pred_check_branch
        %545 = sbr.rel (%p543) target = $region64
      $region63: #{tbip_forward_pallas.1} parent=59 // pred_region
        %s546 = smul.u32 2, %s26
        %p547 = scmp.lt.s32.totalorder %s546, 3
        %s548 = scalar_select %p547, %s546, 3
        %s549 = smul.addr %s548, 8
        %s550 = scalar_lea.vmem %s0, %s549
        %s551 = smul.u32 2, %s26
      $region64: #{tbip_forward_pallas.1} parent=59 // pred_fallthru
        _
      // Predicated region
      $region65: #{tbip_forward_pallas.1} parent=59 // pred_check
        %p552 = pneg %p72
      $region66: #{tbip_forward_pallas.1} parent=59 // pred_check_branch
        %554 = sbr.rel (%p552) target = $region68
      $region67: #{tbip_forward_pallas.1} parent=59 // pred_region
        %s555 = smul.u32 2, %s26
        %p556 = scmp.lt.s32.totalorder %s555, 3
        %s557 = scalar_select %p556, %s555, 3
        %s558 = smul.addr %s557, 8
        %s559 = scalar_lea.vmem %s1, %s558
        %s560 = smul.u32 2, %s26
      $region68: #{tbip_forward_pallas.1} parent=59 // pred_fallthru
        _
      // Predicated region
      $region69: #{tbip_forward_pallas.1} parent=59 // pred_check
        %p561 = pneg %p98
      $region70: #{tbip_forward_pallas.1} parent=59 // pred_check_branch
        %563 = sbr.rel (%p561) target = $region72
      $region71: #{tbip_forward_pallas.1} parent=59 // pred_region
        %s564 = smul.u32 2, %s26
        %p565 = scmp.lt.s32.totalorder %s564, 3
        %s566 = scalar_select %p565, %s564, 3
        %s567 = smul.addr %s566, 2
        %s568 = smul.addr %s567, 8
        %s569 = scalar_lea.vmem %s2, %s568
        %s570 = smul.u32 2, %s26
      $region72: #{tbip_forward_pallas.1} parent=59 // pred_fallthru
        _
      // Predicated region
      $region73: #{tbip_forward_pallas.1} parent=59 // pred_check
        %p571 = pneg %p124
      $region74: #{tbip_forward_pallas.1} parent=59 // pred_check_branch
        %573 = sbr.rel (%p571) target = $region76
      $region75: #{tbip_forward_pallas.1} parent=59 // pred_region
        %s574 = smul.u32 2, %s26
        %p575 = scmp.lt.s32.totalorder %s574, 3
        %s576 = scalar_select %p575, %s574, 3
        %s577 = smul.addr %s576, 8
        %s578 = scalar_lea.vmem %s3, %s577
        %s579 = smul.u32 2, %s26
      $region76: #{tbip_forward_pallas.1} parent=59 // pred_fallthru
        _
      // Predicated region
      $region77: #{tbip_forward_pallas.1} parent=59 // pred_check
        %p580 = pneg %p150
      $region78: #{tbip_forward_pallas.1} parent=59 // pred_check_branch
        %582 = sbr.rel (%p580) target = $region80
      $region79: #{tbip_forward_pallas.1} parent=59 // pred_region
        %s583 = smul.u32 2, %s26
        %p584 = scmp.lt.s32.totalorder %s583, 3
        %s585 = scalar_select %p584, %s583, 3
        %s586 = smul.addr %s585, 8
        %s587 = scalar_lea.vmem %s4, %s586
        %s588 = smul.u32 2, %s26
      $region80: #{tbip_forward_pallas.1} parent=59 // pred_fallthru
        _
      // Predicated region
      $region81: #{tbip_forward_pallas.1} parent=59 // pred_check
        %p589 = pneg %p176
      $region82: #{tbip_forward_pallas.1} parent=59 // pred_check_branch
        %591 = sbr.rel (%p589) target = $region84
      $region83: #{tbip_forward_pallas.1} parent=59 // pred_region
        %s592 = smul.u32 2, %s26
        %p593 = scmp.lt.s32.totalorder %s592, 3
        %s594 = scalar_select %p593, %s592, 3
        %s595 = smul.addr %s594, 8
        %s596 = scalar_lea.vmem %s5, %s595
        %s597 = smul.u32 2, %s26
      $region84: #{tbip_forward_pallas.1} parent=59 // pred_fallthru
        _
    $region60: #{tbip_forward_pallas.1} parent=5 // pred_fallthru
      _
    %p598 = scmp.le.s32.totalorder 1, %s26
    %p599 = scmp.lt.s32.totalorder %s26, 3
    %p600 = pnand %p598, %p599
    %p601 = pneg %p600
    // Predicated region
    $region85: #{tbip_forward_pallas.1} parent=5 // pred_check
      _
    $region86: #{tbip_forward_pallas.1} parent=5 // pred_check_branch
      %603 = sbr.rel (%p600) target = $region88
    $region87: #{tbip_forward_pallas.1} parent=5 // pred_region
      %s604 = ssub.s32 %s26, 1
      %s605 = smul.u32 2, %s31
      %p606 = scmp.lt.s32.totalorder %s605, 3
      %s607 = scalar_select %p606, %s605, 3
      %s608 = smul.addr %s607, 8
      %s609 = scalar_lea.vmem %s0, %s608
      %p610 = pneg %p52
      %p611 = pneg %p49
      %s612 = smul.u32 2, %s31
      %p613 = scmp.lt.s32.totalorder %s612, 3
      %s614 = scalar_select %p613, %s612, 3
      %s615 = smul.addr %s614, 8
      %s616 = scalar_lea.vmem %s1, %s615
      %p617 = pneg %p78
      %p618 = pneg %p75
      %s619 = smul.u32 2, %s31
      %p620 = scmp.lt.s32.totalorder %s619, 3
      %s621 = scalar_select %p620, %s619, 3
      %s622 = smul.addr %s621, 2
      %s623 = smul.addr %s622, 8
      %s624 = scalar_lea.vmem %s2, %s623
      %p625 = pneg %p104
      %p626 = pneg %p101
      %s627 = smul.u32 2, %s31
      %p628 = scmp.lt.s32.totalorder %s627, 3
      %s629 = scalar_select %p628, %s627, 3
      %s630 = smul.addr %s629, 8
      %s631 = scalar_lea.vmem %s3, %s630
      %p632 = pneg %p130
      %p633 = pneg %p127
      %s634 = smul.u32 2, %s31
      %p635 = scmp.lt.s32.totalorder %s634, 3
      %s636 = scalar_select %p635, %s634, 3
      %s637 = smul.addr %s636, 8
      %s638 = scalar_lea.vmem %s4, %s637
      %p639 = pneg %p156
      %p640 = pneg %p153
      %s641 = smul.u32 2, %s31
      %p642 = scmp.lt.s32.totalorder %s641, 3
      %s643 = scalar_select %p642, %s641, 3
      %s644 = smul.addr %s643, 8
      %s645 = scalar_lea.vmem %s5, %s644
      %p646 = pneg %p182
      %p647 = pneg %p179
      %p648 = pneg %p203
      %p649 = pneg %p200
      %p650 = pneg %p224
      %p651 = pneg %p221
      %p652 = pneg %p245
      %p653 = pneg %p242
      %p654 = pneg %p266
      %p655 = pneg %p263
      %p656 = pneg %p287
      %p657 = pneg %p284
      %p658 = pneg %p308
      %p659 = pneg %p305
      %p660 = pneg %p329
      %p661 = pneg %p326
      %p662 = pneg %p350
      %p663 = pneg %p347
      %p664 = pneg %p371
      %p665 = pneg %p368
      %p666 = pneg %p392
      %p667 = pneg %p389
      %p668 = pneg %p413
      %p669 = pneg %p410
      %p670 = pneg %p439
      %p671 = pneg %p436
      %p672 = scmp.lt.s32.totalorder %s31, 1
      %s673 = scalar_select %p672, %s31, 1
      %s674 = smul.addr %s673, 2
      %s675 = scalar_lea.vmem %s17, %s674
      %p676 = pneg %p465
      %p677 = pneg %p462
      %p678 = scmp.lt.s32.totalorder %s31, 1
      %s679 = scalar_select %p678, %s31, 1
      %s680 = smul.addr %s679, 2
      %s681 = scalar_lea.vmem %s18, %s680
      %p682 = pneg %p491
      %p683 = pneg %p488
      %p684 = scmp.lt.s32.totalorder %s31, 1
      %s685 = scalar_select %p684, %s31, 1
      %s686 = smul.addr %s685, 2
      %s687 = scalar_lea.vmem %s19, %s686
      %s688 = smul.u32 2, %s31
      %p689 = scmp.lt.s32.totalorder %s688, 3
      %s690 = scalar_select %p689, %s688, 3
      %s691 = smul.addr %s690, 8
      %s692 = scalar_lea.vmem %s0, %s691
      %s693 = smul.u32 2, %s31
      %s694 = smul.u32 2, %s31
      %p695 = scmp.lt.s32.totalorder %s694, 3
      %s696 = scalar_select %p695, %s694, 3
      %s697 = smul.addr %s696, 8
      %s698 = scalar_lea.vmem %s1, %s697
      %s699 = smul.u32 2, %s31
      %s700 = smul.u32 2, %s31
      %p701 = scmp.lt.s32.totalorder %s700, 3
      %s702 = scalar_select %p701, %s700, 3
      %s703 = smul.addr %s702, 2
      %s704 = smul.addr %s703, 8
      %s705 = scalar_lea.vmem %s2, %s704
      %s706 = smul.u32 2, %s31
      %s707 = smul.u32 2, %s31
      %p708 = scmp.lt.s32.totalorder %s707, 3
      %s709 = scalar_select %p708, %s707, 3
      %s710 = smul.addr %s709, 8
      %s711 = scalar_lea.vmem %s3, %s710
      %s712 = smul.u32 2, %s31
      %s713 = smul.u32 2, %s31
      %p714 = scmp.lt.s32.totalorder %s713, 3
      %s715 = scalar_select %p714, %s713, 3
      %s716 = smul.addr %s715, 8
      %s717 = scalar_lea.vmem %s4, %s716
      %s718 = smul.u32 2, %s31
      %s719 = smul.u32 2, %s31
      %p720 = scmp.lt.s32.totalorder %s719, 3
      %s721 = scalar_select %p720, %s719, 3
      %s722 = smul.addr %s721, 8
      %s723 = scalar_lea.vmem %s5, %s722
      %s724 = smul.u32 2, %s31
      %p725 = scmp.lt.s32.totalorder %s31, 1
      %s726 = scalar_select %p725, %s31, 1
      %s727 = smul.addr %s726, 2
      %s728 = scalar_lea.vmem %s17, %s727
      %p729 = scmp.lt.s32.totalorder %s31, 1
      %s730 = scalar_select %p729, %s31, 1
      %s731 = smul.addr %s730, 2
      %s732 = scalar_lea.vmem %s18, %s731
      %p733 = scmp.lt.s32.totalorder %s31, 1
      %s734 = scalar_select %p733, %s31, 1
      %s735 = smul.addr %s734, 2
      %s736 = scalar_lea.vmem %s19, %s735
      %v737 = vld [vmem:[%s6] sm:$0xff]
      %v738 = vld [vmem:[%s7] sm:$0xff]
      %v739 = vld [vmem:[%s8] sm:$0xff]
      %740 = vadd.xlane.f32.xlu0 %v739
      %v741 = vpop.xlane.xlu0 %740
      %v742 = vrot.slane %v741, 4
      %v743 = vadd.f32 %v741, %v742
      %v744 = vrot.slane %v743, 2
      %v745 = vadd.f32 %v743, %v744
      %v746 = vrot.slane %v745, 1
      %v747 = vadd.f32 %v745, %v746
      %s748 = vtos %v747
      %v749 = vld [vmem:[%s9] sm:$0xff]
      %v750 = vld [vmem:[%s9 + $0x8] sm:$0xff]
      %v751 = vld [vmem:[%s11] sm:$0xff]
      %v752 = vld [vmem:[%s13] sm:$0xff]
      %v753 = vld [vmem:[%s15] sm:$0xff]
      %v754 = vld [vmem:[%s10] sm:$0xff]
      %v755 = vld [vmem:[%s10 + $0x8] sm:$0xff]
      %v756 = vmax.f32 %v754, 0.0
      %v757 = vmax.f32 %v755, 0.0
      %v758 = vand.u32 2147483647, %v754
      %v759 = vand.u32 2147483647, %v755
      %v760 = vsub.f32 0.0, %v758
      %v761 = vsub.f32 0.0, %v759
      %v762 = vmul.f32 %v760, 1.442695
      %v763 = vpow.pop %v762
      %v764 = vmul.f32 %v761, 1.442695
      %v765 = vpow.pop %v764
      %v766 = vadd.f32 %v763, 1.0
      %v767 = vlog2.pop %v766
      %v768 = vmul.f32 %v767, 0.6931472
      %v769 = vmul.f32 -0.5, %v763
      %v770 = vadd.f32 %v769, 1.0
      %v771 = vmul.f32 %v770, %v763
      %v772 = vand.u32 2147483647, %v763
      %vm773 = vcmp.lt.f32.partialorder %v772, 0.0004427343
      %v774 = vsel %vm773, %v771, %v768
      %v775 = vadd.f32 %v765, 1.0
      %v776 = vlog2.pop %v775
      %v777 = vmul.f32 %v776, 0.6931472
      %v778 = vmul.f32 -0.5, %v765
      %v779 = vadd.f32 %v778, 1.0
      %v780 = vmul.f32 %v779, %v765
      %v781 = vand.u32 2147483647, %v765
      %vm782 = vcmp.lt.f32.partialorder %v781, 0.0004427343
      %v783 = vsel %vm782, %v780, %v777
      %v784 = vadd.f32 %v756, %v774
      %v785 = vadd.f32 %v757, %v783
      %v786 = vrcp.pop %v784
      %v787 = vmul.f32 1.0, %v786
      %v788 = vrcp.pop %v785
      %v789 = vmul.f32 1.0, %v788
      %v790 = vlog2.pop %v784
      %v791 = vmul.f32 %v790, 0.6931472
      %v792 = vlog2.pop %v785
      %v793 = vmul.f32 %v792, 0.6931472
      %v794 = vld [vmem:[%s12] sm:$0xff]
      %v795 = vmax.f32 %v794, 0.0
      %v796 = vand.u32 2147483647, %v794
      %v797 = vsub.f32 0.0, %v796
      %v798 = vmul.f32 %v797, 1.442695
      %v799 = vpow.pop %v798
      %v800 = vadd.f32 %v799, 1.0
      %v801 = vlog2.pop %v800
      %v802 = vmul.f32 %v801, 0.6931472
      %v803 = vmul.f32 -0.5, %v799
      %v804 = vadd.f32 %v803, 1.0
      %v805 = vmul.f32 %v804, %v799
      %v806 = vand.u32 2147483647, %v799
      %vm807 = vcmp.lt.f32.partialorder %v806, 0.0004427343
      %v808 = vsel %vm807, %v805, %v802
      %v809 = vadd.f32 %v795, %v808
      %v810 = vrcp.pop %v809
      %v811 = vmul.f32 1.0, %v810
      %v812 = vlog2.pop %v809
      %v813 = vmul.f32 %v812, 0.6931472
      %v814 = vld [vmem:[%s14] sm:$0xff]
      %v815 = vmax.f32 %v814, 0.0
      %v816 = vand.u32 2147483647, %v814
      %v817 = vsub.f32 0.0, %v816
      %v818 = vmul.f32 %v817, 1.442695
      %v819 = vpow.pop %v818
      %v820 = vadd.f32 %v819, 1.0
      %v821 = vlog2.pop %v820
      %v822 = vmul.f32 %v821, 0.6931472
      %v823 = vmul.f32 -0.5, %v819
      %v824 = vadd.f32 %v823, 1.0
      %v825 = vmul.f32 %v824, %v819
      %v826 = vand.u32 2147483647, %v819
      %vm827 = vcmp.lt.f32.partialorder %v826, 0.0004427343
      %v828 = vsel %vm827, %v825, %v822
      %v829 = vadd.f32 %v815, %v828
      %v830 = vrcp.pop %v829
      %v831 = vmul.f32 1.0, %v830
      %v832 = vlog2.pop %v829
      %v833 = vmul.f32 %v832, 0.6931472
      %v834 = vld [vmem:[%s16] sm:$0xff]
      %v835 = vmax.f32 %v834, 0.0
      %v836 = vand.u32 2147483647, %v834
      %v837 = vsub.f32 0.0, %v836
      %v838 = vmul.f32 %v837, 1.442695
      %v839 = vpow.pop %v838
      %v840 = vadd.f32 %v839, 1.0
      %v841 = vlog2.pop %v840
      %v842 = vmul.f32 %v841, 0.6931472
      %v843 = vmul.f32 -0.5, %v839
      %v844 = vadd.f32 %v843, 1.0
      %v845 = vmul.f32 %v844, %v839
      %v846 = vand.u32 2147483647, %v839
      %vm847 = vcmp.lt.f32.partialorder %v846, 0.0004427343
      %v848 = vsel %vm847, %v845, %v842
      %v849 = vadd.f32 %v835, %v848
      %v850 = vrcp.pop %v849
      %v851 = vmul.f32 1.0, %v850
      %v852 = vlog2.pop %v849
      %v853 = vmul.f32 %v852, 0.6931472
      %v854 = vld [vmem:[%s692] sm:$0xff]
      %v855 = vld [vmem:[%s698] sm:$0xff]
      %v856 = vld [vmem:[%s705] sm:$0xff]
      %v857 = vld [vmem:[%s705 + $0x8] sm:$0xff]
      %v858 = vld [vmem:[%s711] sm:$0xff]
      %v859 = vld [vmem:[%s717] sm:$0xff]
      %v860 = vld [vmem:[%s723] sm:$0xff]
      %v862 = vcombine.high %v855, %v855
      %v864 = vunpack.c.l.s4 1966171168
      %v865 = vunpack.c.0.s8 %v864
      %v866 = vlaneseq
      %v867 = vshrl.u32 %v866, 7
      %v868 = vsub.s32 %v865, %v867
      %v869 = vrot.slane %v855, %v868
      %v871 = vunpack.c.l.s4 1966171168
      %v872 = vunpack.c.0.s8 %v871
      %v873 = vlaneseq
      %v874 = vshrl.u32 %v873, 7
      %v875 = vsub.s32 %v872, %v874
      %v876 = vrot.slane %v862, %v875
      %v877 = vcombine.high %v869, %v869
      %v878 = vcombine.high %v876, %v876
      %v880 = vunpack.c.l.s4 1966171168
      %v881 = vunpack.c.0.s8 %v880
      %v882 = vlaneseq
      %v883 = vshrl.u32 %v882, 7
      %v884 = vsub.s32 %v881, %v883
      %v885 = vrot.slane %v869, %v884
      %v887 = vunpack.c.l.s4 1966171168
      %v888 = vunpack.c.0.s8 %v887
      %v889 = vlaneseq
      %v890 = vshrl.u32 %v889, 7
      %v891 = vsub.s32 %v888, %v890
      %v892 = vrot.slane %v876, %v891
      %v894 = vunpack.c.l.s4 1966171168
      %v895 = vunpack.c.0.s8 %v894
      %v896 = vlaneseq
      %v897 = vshrl.u32 %v896, 7
      %v898 = vsub.s32 %v895, %v897
      %v899 = vrot.slane %v877, %v898
      %v901 = vunpack.c.l.s4 1966171168
      %v902 = vunpack.c.0.s8 %v901
      %v903 = vlaneseq
      %v904 = vshrl.u32 %v903, 7
      %v905 = vsub.s32 %v902, %v904
      %v906 = vrot.slane %v878, %v905
      %v907 = vcombine.high %v885, %v885
      %v908 = vcombine.high %v892, %v892
      %v909 = vcombine.high %v899, %v899
      %v910 = vcombine.high %v906, %v906
      %v911 = vlaneseq
      %v912 = vshrl.u32 %v911, 7
      %v913 = vsub.s32 0, %v912
      %v914 = vrot.slane %v885, %v913
      %v915 = vlaneseq
      %v916 = vshrl.u32 %v915, 7
      %v917 = vsub.s32 0, %v916
      %v918 = vrot.slane %v899, %v917
      %v919 = vlaneseq
      %v920 = vshrl.u32 %v919, 7
      %v921 = vsub.s32 0, %v920
      %v922 = vrot.slane %v907, %v921
      %v923 = vlaneseq
      %v924 = vshrl.u32 %v923, 7
      %v925 = vsub.s32 0, %v924
      %v926 = vrot.slane %v909, %v925
      %v927 = vlaneseq
      %v928 = vshrl.u32 %v927, 7
      %v929 = vsub.s32 0, %v928
      %v930 = vrot.slane %v892, %v929
      %v931 = vlaneseq
      %v932 = vshrl.u32 %v931, 7
      %v933 = vsub.s32 0, %v932
      %v934 = vrot.slane %v906, %v933
      %v935 = vlaneseq
      %v936 = vshrl.u32 %v935, 7
      %v937 = vsub.s32 0, %v936
      %v938 = vrot.slane %v908, %v937
      %v939 = vlaneseq
      %v940 = vshrl.u32 %v939, 7
      %v941 = vsub.s32 0, %v940
      %v942 = vrot.slane %v910, %v941
      %943 = vset.pattern.permute.xlu0 0
      %944 = vperm.xlu0 %943, %v914
      %v945 = vpop.permute.xlu0 %944
      %947 = vset.pattern.permute.xlu0 0
      %948 = vperm.xlu0 %947, %v918
      %v949 = vpop.permute.xlu0 %948
      %951 = vset.pattern.permute.xlu0 0
      %952 = vperm.xlu0 %951, %v922
      %v953 = vpop.permute.xlu0 %952
      %955 = vset.pattern.permute.xlu0 0
      %956 = vperm.xlu0 %955, %v926
      %v957 = vpop.permute.xlu0 %956
      %959 = vset.pattern.permute.xlu0 0
      %960 = vperm.xlu0 %959, %v930
      %v961 = vpop.permute.xlu0 %960
      %963 = vset.pattern.permute.xlu0 0
      %964 = vperm.xlu0 %963, %v934
      %v965 = vpop.permute.xlu0 %964
      %967 = vset.pattern.permute.xlu0 0
      %968 = vperm.xlu0 %967, %v938
      %v969 = vpop.permute.xlu0 %968
      %971 = vset.pattern.permute.xlu0 0
      %972 = vperm.xlu0 %971, %v942
      %v973 = vpop.permute.xlu0 %972
      %v975 = vmul.f32 %v945, %v859
      %v976 = vmul.f32 %v949, %v859
      %v977 = vmul.f32 %v953, %v859
      %v978 = vmul.f32 %v957, %v859
      %v979 = vmul.f32 %v961, %v859
      %v980 = vmul.f32 %v965, %v859
      %v981 = vmul.f32 %v969, %v859
      %v982 = vmul.f32 %v973, %v859
      %v983 = vmul.f32 %v975, 1.442695
      %v984 = vpow.pop %v983
      %v985 = vmul.f32 %v976, 1.442695
      %v986 = vpow.pop %v985
      %v987 = vmul.f32 %v977, 1.442695
      %v988 = vpow.pop %v987
      %v989 = vmul.f32 %v978, 1.442695
      %v990 = vpow.pop %v989
      %v991 = vmul.f32 %v979, 1.442695
      %v992 = vpow.pop %v991
      %v993 = vmul.f32 %v980, 1.442695
      %v994 = vpow.pop %v993
      %v995 = vmul.f32 %v981, 1.442695
      %v996 = vpow.pop %v995
      %v997 = vmul.f32 %v982, 1.442695
      %v998 = vpow.pop %v997
      %v999 = vlaneseq
      %v1000 = vshrl.u32 %v999, 7
      %v1001 = vsub.s32 0, %v1000
      %v1002 = vrot.slane %v854, %v1001
      %1004 = vbcast.lane.b32.xlu0 %v1002, 256
      %v1005 = vpop.permute.xlu0 %1004
      %v1006 = vlaneseq
      %v1007 = vshrl.u32 %v1006, 7
      %v1008 = vsub.s32 1, %v1007
      %v1009 = vrot.slane %v854, %v1008
      %1011 = vbcast.lane.b32.xlu0 %v1009, 256
      %v1012 = vpop.permute.xlu0 %1011
      %v1013 = vlaneseq
      %v1014 = vshrl.u32 %v1013, 7
      %v1015 = vsub.s32 2, %v1014
      %v1016 = vrot.slane %v854, %v1015
      %1018 = vbcast.lane.b32.xlu0 %v1016, 256
      %v1019 = vpop.permute.xlu0 %1018
      %v1020 = vlaneseq
      %v1021 = vshrl.u32 %v1020, 7
      %v1022 = vsub.s32 3, %v1021
      %v1023 = vrot.slane %v854, %v1022
      %1025 = vbcast.lane.b32.xlu0 %v1023, 256
      %v1026 = vpop.permute.xlu0 %1025
      %v1027 = vlaneseq
      %v1028 = vshrl.u32 %v1027, 7
      %v1029 = vsub.s32 4, %v1028
      %v1030 = vrot.slane %v854, %v1029
      %1032 = vbcast.lane.b32.xlu0 %v1030, 256
      %v1033 = vpop.permute.xlu0 %1032
      %v1034 = vlaneseq
      %v1035 = vshrl.u32 %v1034, 7
      %v1036 = vsub.s32 5, %v1035
      %v1037 = vrot.slane %v854, %v1036
      %1039 = vbcast.lane.b32.xlu0 %v1037, 256
      %v1040 = vpop.permute.xlu0 %1039
      %v1041 = vlaneseq
      %v1042 = vshrl.u32 %v1041, 7
      %v1043 = vsub.s32 6, %v1042
      %v1044 = vrot.slane %v854, %v1043
      %1046 = vbcast.lane.b32.xlu0 %v1044, 256
      %v1047 = vpop.permute.xlu0 %1046
      %v1048 = vlaneseq
      %v1049 = vshrl.u32 %v1048, 7
      %v1050 = vsub.s32 7, %v1049
      %v1051 = vrot.slane %v854, %v1050
      %1053 = vbcast.lane.b32.xlu0 %v1051, 256
      %v1054 = vpop.permute.xlu0 %1053
      %v1055 = vmul.f32 %v1005, %v858
      %v1056 = vmul.f32 %v1012, %v858
      %v1057 = vmul.f32 %v1019, %v858
      %v1058 = vmul.f32 %v1026, %v858
      %v1059 = vmul.f32 %v1033, %v858
      %v1060 = vmul.f32 %v1040, %v858
      %v1061 = vmul.f32 %v1047, %v858
      %v1062 = vmul.f32 %v1054, %v858
      %v1063 = vmul.f32 %v1055, %v984
      %v1064 = vmul.f32 %v1056, %v986
      %v1065 = vmul.f32 %v1057, %v988
      %v1066 = vmul.f32 %v1058, %v990
      %v1067 = vmul.f32 %v1059, %v992
      %v1068 = vmul.f32 %v1060, %v994
      %v1069 = vmul.f32 %v1061, %v996
      %v1070 = vmul.f32 %v1062, %v998
      %v1071 = vrot.slane %v1063, 4
      %v1072 = vadd.f32 %v1063, %v1071
      %v1073 = vrot.slane %v1072, 2
      %v1074 = vadd.f32 %v1072, %v1073
      %v1075 = vrot.slane %v1074, 1
      %v1076 = vadd.f32 %v1074, %v1075
      %v1077 = vrot.slane %v1064, 4
      %v1078 = vadd.f32 %v1064, %v1077
      %v1079 = vrot.slane %v1078, 2
      %v1080 = vadd.f32 %v1078, %v1079
      %v1081 = vrot.slane %v1080, 1
      %v1082 = vadd.f32 %v1080, %v1081
      %v1083 = vrot.slane %v1065, 4
      %v1084 = vadd.f32 %v1065, %v1083
      %v1085 = vrot.slane %v1084, 2
      %v1086 = vadd.f32 %v1084, %v1085
      %v1087 = vrot.slane %v1086, 1
      %v1088 = vadd.f32 %v1086, %v1087
      %v1089 = vrot.slane %v1066, 4
      %v1090 = vadd.f32 %v1066, %v1089
      %v1091 = vrot.slane %v1090, 2
      %v1092 = vadd.f32 %v1090, %v1091
      %v1093 = vrot.slane %v1092, 1
      %v1094 = vadd.f32 %v1092, %v1093
      %v1095 = vrot.slane %v1067, 4
      %v1096 = vadd.f32 %v1067, %v1095
      %v1097 = vrot.slane %v1096, 2
      %v1098 = vadd.f32 %v1096, %v1097
      %v1099 = vrot.slane %v1098, 1
      %v1100 = vadd.f32 %v1098, %v1099
      %v1101 = vrot.slane %v1068, 4
      %v1102 = vadd.f32 %v1068, %v1101
      %v1103 = vrot.slane %v1102, 2
      %v1104 = vadd.f32 %v1102, %v1103
      %v1105 = vrot.slane %v1104, 1
      %v1106 = vadd.f32 %v1104, %v1105
      %v1107 = vrot.slane %v1069, 4
      %v1108 = vadd.f32 %v1069, %v1107
      %v1109 = vrot.slane %v1108, 2
      %v1110 = vadd.f32 %v1108, %v1109
      %v1111 = vrot.slane %v1110, 1
      %v1112 = vadd.f32 %v1110, %v1111
      %v1113 = vrot.slane %v1070, 4
      %v1114 = vadd.f32 %v1070, %v1113
      %v1115 = vrot.slane %v1114, 2
      %v1116 = vadd.f32 %v1114, %v1115
      %v1117 = vrot.slane %v1116, 1
      %v1118 = vadd.f32 %v1116, %v1117
      %1120 = vset.pattern.permute.xlu0 0
      %1121 = vperm.xlu0 %1120, %v737
      %v1122 = vpop.permute.xlu0 %1121
      %vm1132 = vcmask 1041409
      %v1133 = vsel %vm1132, %v1082, %v1076
      %vm1134 = vcmask 1042434
      %v1135 = vsel %vm1134, %v1088, %v1133
      %vm1136 = vcmask 1043459
      %v1137 = vsel %vm1136, %v1094, %v1135
      %vm1138 = vcmask 1044484
      %v1139 = vsel %vm1138, %v1100, %v1137
      %vm1140 = vcmask 1045509
      %v1141 = vsel %vm1140, %v1106, %v1139
      %vm1142 = vcmask 1046534
      %v1143 = vsel %vm1142, %v1112, %v1141
      %vm1144 = vcmask 1047559
      %v1145 = vsel %vm1144, %v1118, %v1143
      %v1147 = vmul.f32 %v1122, %v1145
      %v1148 = vlog2.pop %v1147
      %v1149 = vmul.f32 %v1148, 0.6931472
      %v1150 = vmul.f32 %v738, %v1149
      %v1151 = vsub.f32 %v1150, %v1147
      %1152 = vadd.xlane.f32.xlu0 %v1151
      %v1153 = vpop.xlane.xlu0 %1152
      %v1154 = vrot.slane %v1153, 4
      %v1155 = vadd.f32 %v1153, %v1154
      %v1156 = vrot.slane %v1155, 2
      %v1157 = vadd.f32 %v1155, %v1156
      %v1158 = vrot.slane %v1157, 1
      %v1159 = vadd.f32 %v1157, %v1158
      %s1160 = vtos %v1159
      %s1161 = ssub.f32 %s1160, %s748
      %v1162 = vlog2.pop %v856
      %v1163 = vmul.f32 %v1162, 0.6931472
      %v1164 = vlog2.pop %v857
      %v1165 = vmul.f32 %v1164, 0.6931472
      %v1166 = vlog2.pop %v858
      %v1167 = vmul.f32 %v1166, 0.6931472
      %v1168 = vmul.f32 %v1163, -0.7
      %v1169 = vmul.f32 %v1165, -0.7
      %v1170 = vadd.f32 %v1168, -1.4569899
      %v1171 = vadd.f32 %v1169, -1.4569899
      %v1172 = vmul.f32 %v856, 0.3
      %v1173 = vmul.f32 %v857, 0.3
      %v1174 = vsub.f32 %v1170, %v1172
      %v1175 = vsub.f32 %v1171, %v1173
      %vm1176 = vcmask 64512
      %v1177 = vsel %vm1176, %v1174, 0.0
      %v1178 = vsel %vm1176, %v1175, 0.0
      %v1179 = vadd.f32 %v1177, %v1178
      %1180 = vadd.xlane.f32.xlu0 %v1179
      %v1181 = vpop.xlane.xlu0 %1180
      %v1182 = vrot.slane %v1181, 4
      %v1183 = vadd.f32 %v1181, %v1182
      %v1184 = vrot.slane %v1183, 2
      %v1185 = vadd.f32 %v1183, %v1184
      %v1186 = vrot.slane %v1185, 1
      %v1187 = vadd.f32 %v1185, %v1186
      %s1188 = vtos %v1187
      %v1189 = vmul.f32 %v1167, -0.7
      %v1190 = vadd.f32 %v1189, -1.4569899
      %v1191 = vmul.f32 %v858, 0.3
      %v1192 = vsub.f32 %v1190, %v1191
      %1193 = vadd.xlane.f32.xlu0 %v1192
      %v1194 = vpop.xlane.xlu0 %1193
      %v1195 = vrot.slane %v1194, 4
      %v1196 = vadd.f32 %v1194, %v1195
      %v1197 = vrot.slane %v1196, 2
      %v1198 = vadd.f32 %v1196, %v1197
      %v1199 = vrot.slane %v1198, 1
      %v1200 = vadd.f32 %v1198, %v1199
      %s1201 = vtos %v1200
      %s1202 = sadd.f32 %s1188, %s1201
      %v1203 = vmul.f32 %v859, -0.5
      %v1204 = vmul.f32 %v1203, %v859
      %v1205 = vsub.f32 %v1204, 0.9189385
      %1206 = vadd.xlane.f32.xlu0 %v1205
      %v1207 = vpop.xlane.xlu0 %1206
      %v1208 = vrot.slane %v1207, 4
      %v1209 = vadd.f32 %v1207, %v1208
      %v1210 = vrot.slane %v1209, 2
      %v1211 = vadd.f32 %v1209, %v1210
      %v1212 = vrot.slane %v1211, 1
      %v1213 = vadd.f32 %v1211, %v1212
      %s1214 = vtos %v1213
      %s1215 = sadd.f32 %s1202, %s1214
      %v1216 = vmul.f32 %v860, -0.5
      %v1217 = vmul.f32 %v1216, %v860
      %v1218 = vsub.f32 %v1217, 0.9189385
      %vm1219 = vcmask 7168
      %v1220 = vsel %vm1219, %v1218, 0.0
      %1221 = vadd.xlane.f32.xlu0 %v1220
      %v1222 = vpop.xlane.xlu0 %1221
      %v1223 = vrot.slane %v1222, 4
      %v1224 = vadd.f32 %v1222, %v1223
      %v1225 = vrot.slane %v1224, 2
      %v1226 = vadd.f32 %v1224, %v1225
      %v1227 = vrot.slane %v1226, 1
      %v1228 = vadd.f32 %v1226, %v1227
      %s1229 = vtos %v1228
      %s1230 = sadd.f32 %s1215, %s1229
      %v1231 = vsub.f32 %v1163, %v749
      %v1232 = vsub.f32 %v1165, %v750
      %v1233 = vmul.f32 %v1231, %v787
      %v1234 = vmul.f32 %v1232, %v789
      %v1235 = vmul.f32 %v1233, -0.5
      %v1236 = vmul.f32 %v1234, -0.5
      %v1237 = vmul.f32 %v1235, %v1233
      %v1238 = vmul.f32 %v1236, %v1234
      %v1239 = vsub.f32 %v1237, %v791
      %v1240 = vsub.f32 %v1238, %v793
      %v1241 = vsub.f32 %v1239, 0.9189385
      %v1242 = vsub.f32 %v1240, 0.9189385
      %v1243 = vsub.f32 %v1241, %v1163
      %v1244 = vsub.f32 %v1242, %v1165
      %v1245 = vsel %vm1176, %v1243, 0.0
      %v1246 = vsel %vm1176, %v1244, 0.0
      %v1247 = vadd.f32 %v1245, %v1246
      %1248 = vadd.xlane.f32.xlu0 %v1247
      %v1249 = vpop.xlane.xlu0 %1248
      %v1250 = vrot.slane %v1249, 4
      %v1251 = vadd.f32 %v1249, %v1250
      %v1252 = vrot.slane %v1251, 2
      %v1253 = vadd.f32 %v1251, %v1252
      %v1254 = vrot.slane %v1253, 1
      %v1255 = vadd.f32 %v1253, %v1254
      %s1256 = vtos %v1255
      %v1257 = vsub.f32 %v1167, %v751
      %v1258 = vmul.f32 %v1257, %v811
      %v1259 = vmul.f32 %v1258, -0.5
      %v1260 = vmul.f32 %v1259, %v1258
      %v1261 = vsub.f32 %v1260, %v813
      %v1262 = vsub.f32 %v1261, 0.9189385
      %v1263 = vsub.f32 %v1262, %v1167
      %1264 = vadd.xlane.f32.xlu0 %v1263
      %v1265 = vpop.xlane.xlu0 %1264
      %v1266 = vrot.slane %v1265, 4
      %v1267 = vadd.f32 %v1265, %v1266
      %v1268 = vrot.slane %v1267, 2
      %v1269 = vadd.f32 %v1267, %v1268
      %v1270 = vrot.slane %v1269, 1
      %v1271 = vadd.f32 %v1269, %v1270
      %s1272 = vtos %v1271
      %s1273 = sadd.f32 %s1256, %s1272
      %v1274 = vsub.f32 %v859, %v752
      %v1275 = vmul.f32 %v1274, %v831
      %v1276 = vmul.f32 %v1275, -0.5
      %v1277 = vmul.f32 %v1276, %v1275
      %v1278 = vsub.f32 %v1277, %v833
      %v1279 = vsub.f32 %v1278, 0.9189385
      %1280 = vadd.xlane.f32.xlu0 %v1279
      %v1281 = vpop.xlane.xlu0 %1280
      %v1282 = vrot.slane %v1281, 4
      %v1283 = vadd.f32 %v1281, %v1282
      %v1284 = vrot.slane %v1283, 2
      %v1285 = vadd.f32 %v1283, %v1284
      %v1286 = vrot.slane %v1285, 1
      %v1287 = vadd.f32 %v1285, %v1286
      %s1288 = vtos %v1287
      %s1289 = sadd.f32 %s1273, %s1288
      %v1290 = vsub.f32 %v860, %v753
      %v1291 = vmul.f32 %v1290, %v851
      %v1292 = vmul.f32 %v1291, -0.5
      %v1293 = vmul.f32 %v1292, %v1291
      %v1294 = vsub.f32 %v1293, %v853
      %v1295 = vsub.f32 %v1294, 0.9189385
      %v1296 = vsel %vm1219, %v1295, 0.0
      %1297 = vadd.xlane.f32.xlu0 %v1296
      %v1298 = vpop.xlane.xlu0 %1297
      %v1299 = vrot.slane %v1298, 4
      %v1300 = vadd.f32 %v1298, %v1299
      %v1301 = vrot.slane %v1300, 2
      %v1302 = vadd.f32 %v1300, %v1301
      %v1303 = vrot.slane %v1302, 1
      %v1304 = vadd.f32 %v1302, %v1303
      %s1305 = vtos %v1304
      %s1306 = sadd.f32 %s1289, %s1305
      %v1307 = vstv %s1161
      %1308 = vst [vmem:[%s728] sm:$0x1] %v1307
      %v1309 = vstv %s1230
      %1310 = vst [vmem:[%s732] sm:$0x1] %v1309
      %s1311 = ssub.f32 0.0, %s1306
      %v1312 = vstv %s1311
      %1313 = vst [vmem:[%s736] sm:$0x1] %v1312
      %s1314 = scalar_lea.vmem %s692, 8
      %v1315 = vld [vmem:[%s1314] sm:$0xff]
      %s1316 = scalar_lea.vmem %s698, 8
      %v1317 = vld [vmem:[%s1316] sm:$0xff]
      %s1318 = scalar_lea.vmem %s705, 16
      %v1319 = vld [vmem:[%s1318] sm:$0xff]
      %v1320 = vld [vmem:[%s1318 + $0x8] sm:$0xff]
      %s1321 = scalar_lea.vmem %s711, 8
      %v1322 = vld [vmem:[%s1321] sm:$0xff]
      %s1323 = scalar_lea.vmem %s717, 8
      %v1324 = vld [vmem:[%s1323] sm:$0xff]
      %s1325 = scalar_lea.vmem %s723, 8
      %v1326 = vld [vmem:[%s1325] sm:$0xff]
      %v1328 = vcombine.high %v1317, %v1317
      %v1330 = vunpack.c.l.s4 1966171168
      %v1331 = vunpack.c.0.s8 %v1330
      %v1332 = vlaneseq
      %v1333 = vshrl.u32 %v1332, 7
      %v1334 = vsub.s32 %v1331, %v1333
      %v1335 = vrot.slane %v1317, %v1334
      %v1337 = vunpack.c.l.s4 1966171168
      %v1338 = vunpack.c.0.s8 %v1337
      %v1339 = vlaneseq
      %v1340 = vshrl.u32 %v1339, 7
      %v1341 = vsub.s32 %v1338, %v1340
      %v1342 = vrot.slane %v1328, %v1341
      %v1343 = vcombine.high %v1335, %v1335
      %v1344 = vcombine.high %v1342, %v1342
      %v1346 = vunpack.c.l.s4 1966171168
      %v1347 = vunpack.c.0.s8 %v1346
      %v1348 = vlaneseq
      %v1349 = vshrl.u32 %v1348, 7
      %v1350 = vsub.s32 %v1347, %v1349
      %v1351 = vrot.slane %v1335, %v1350
      %v1353 = vunpack.c.l.s4 1966171168
      %v1354 = vunpack.c.0.s8 %v1353
      %v1355 = vlaneseq
      %v1356 = vshrl.u32 %v1355, 7
      %v1357 = vsub.s32 %v1354, %v1356
      %v1358 = vrot.slane %v1342, %v1357
      %v1360 = vunpack.c.l.s4 1966171168
      %v1361 = vunpack.c.0.s8 %v1360
      %v1362 = vlaneseq
      %v1363 = vshrl.u32 %v1362, 7
      %v1364 = vsub.s32 %v1361, %v1363
      %v1365 = vrot.slane %v1343, %v1364
      %v1367 = vunpack.c.l.s4 1966171168
      %v1368 = vunpack.c.0.s8 %v1367
      %v1369 = vlaneseq
      %v1370 = vshrl.u32 %v1369, 7
      %v1371 = vsub.s32 %v1368, %v1370
      %v1372 = vrot.slane %v1344, %v1371
      %v1373 = vcombine.high %v1351, %v1351
      %v1374 = vcombine.high %v1358, %v1358
      %v1375 = vcombine.high %v1365, %v1365
      %v1376 = vcombine.high %v1372, %v1372
      %v1377 = vlaneseq
      %v1378 = vshrl.u32 %v1377, 7
      %v1379 = vsub.s32 0, %v1378
      %v1380 = vrot.slane %v1351, %v1379
      %v1381 = vlaneseq
      %v1382 = vshrl.u32 %v1381, 7
      %v1383 = vsub.s32 0, %v1382
      %v1384 = vrot.slane %v1365, %v1383
      %v1385 = vlaneseq
      %v1386 = vshrl.u32 %v1385, 7
      %v1387 = vsub.s32 0, %v1386
      %v1388 = vrot.slane %v1373, %v1387
      %v1389 = vlaneseq
      %v1390 = vshrl.u32 %v1389, 7
      %v1391 = vsub.s32 0, %v1390
      %v1392 = vrot.slane %v1375, %v1391
      %v1393 = vlaneseq
      %v1394 = vshrl.u32 %v1393, 7
      %v1395 = vsub.s32 0, %v1394
      %v1396 = vrot.slane %v1358, %v1395
      %v1397 = vlaneseq
      %v1398 = vshrl.u32 %v1397, 7
      %v1399 = vsub.s32 0, %v1398
      %v1400 = vrot.slane %v1372, %v1399
      %v1401 = vlaneseq
      %v1402 = vshrl.u32 %v1401, 7
      %v1403 = vsub.s32 0, %v1402
      %v1404 = vrot.slane %v1374, %v1403
      %v1405 = vlaneseq
      %v1406 = vshrl.u32 %v1405, 7
      %v1407 = vsub.s32 0, %v1406
      %v1408 = vrot.slane %v1376, %v1407
      %1409 = vset.pattern.permute.xlu0 0
      %1410 = vperm.xlu0 %1409, %v1380
      %v1411 = vpop.permute.xlu0 %1410
      %1413 = vset.pattern.permute.xlu0 0
      %1414 = vperm.xlu0 %1413, %v1384
      %v1415 = vpop.permute.xlu0 %1414
      %1417 = vset.pattern.permute.xlu0 0
      %1418 = vperm.xlu0 %1417, %v1388
      %v1419 = vpop.permute.xlu0 %1418
      %1421 = vset.pattern.permute.xlu0 0
      %1422 = vperm.xlu0 %1421, %v1392
      %v1423 = vpop.permute.xlu0 %1422
      %1425 = vset.pattern.permute.xlu0 0
      %1426 = vperm.xlu0 %1425, %v1396
      %v1427 = vpop.permute.xlu0 %1426
      %1429 = vset.pattern.permute.xlu0 0
      %1430 = vperm.xlu0 %1429, %v1400
      %v1431 = vpop.permute.xlu0 %1430
      %1433 = vset.pattern.permute.xlu0 0
      %1434 = vperm.xlu0 %1433, %v1404
      %v1435 = vpop.permute.xlu0 %1434
      %1437 = vset.pattern.permute.xlu0 0
      %1438 = vperm.xlu0 %1437, %v1408
      %v1439 = vpop.permute.xlu0 %1438
      %v1441 = vmul.f32 %v1411, %v1324
      %v1442 = vmul.f32 %v1415, %v1324
      %v1443 = vmul.f32 %v1419, %v1324
      %v1444 = vmul.f32 %v1423, %v1324
      %v1445 = vmul.f32 %v1427, %v1324
      %v1446 = vmul.f32 %v1431, %v1324
      %v1447 = vmul.f32 %v1435, %v1324
      %v1448 = vmul.f32 %v1439, %v1324
      %v1449 = vmul.f32 %v1441, 1.442695
      %v1450 = vpow.pop %v1449
      %v1451 = vmul.f32 %v1442, 1.442695
      %v1452 = vpow.pop %v1451
      %v1453 = vmul.f32 %v1443, 1.442695
      %v1454 = vpow.pop %v1453
      %v1455 = vmul.f32 %v1444, 1.442695
      %v1456 = vpow.pop %v1455
      %v1457 = vmul.f32 %v1445, 1.442695
      %v1458 = vpow.pop %v1457
      %v1459 = vmul.f32 %v1446, 1.442695
      %v1460 = vpow.pop %v1459
      %v1461 = vmul.f32 %v1447, 1.442695
      %v1462 = vpow.pop %v1461
      %v1463 = vmul.f32 %v1448, 1.442695
      %v1464 = vpow.pop %v1463
      %v1465 = vlaneseq
      %v1466 = vshrl.u32 %v1465, 7
      %v1467 = vsub.s32 0, %v1466
      %v1468 = vrot.slane %v1315, %v1467
      %1470 = vbcast.lane.b32.xlu0 %v1468, 256
      %v1471 = vpop.permute.xlu0 %1470
      %v1472 = vlaneseq
      %v1473 = vshrl.u32 %v1472, 7
      %v1474 = vsub.s32 1, %v1473
      %v1475 = vrot.slane %v1315, %v1474
      %1477 = vbcast.lane.b32.xlu0 %v1475, 256
      %v1478 = vpop.permute.xlu0 %1477
      %v1479 = vlaneseq
      %v1480 = vshrl.u32 %v1479, 7
      %v1481 = vsub.s32 2, %v1480
      %v1482 = vrot.slane %v1315, %v1481
      %1484 = vbcast.lane.b32.xlu0 %v1482, 256
      %v1485 = vpop.permute.xlu0 %1484
      %v1486 = vlaneseq
      %v1487 = vshrl.u32 %v1486, 7
      %v1488 = vsub.s32 3, %v1487
      %v1489 = vrot.slane %v1315, %v1488
      %1491 = vbcast.lane.b32.xlu0 %v1489, 256
      %v1492 = vpop.permute.xlu0 %1491
      %v1493 = vlaneseq
      %v1494 = vshrl.u32 %v1493, 7
      %v1495 = vsub.s32 4, %v1494
      %v1496 = vrot.slane %v1315, %v1495
      %1498 = vbcast.lane.b32.xlu0 %v1496, 256
      %v1499 = vpop.permute.xlu0 %1498
      %v1500 = vlaneseq
      %v1501 = vshrl.u32 %v1500, 7
      %v1502 = vsub.s32 5, %v1501
      %v1503 = vrot.slane %v1315, %v1502
      %1505 = vbcast.lane.b32.xlu0 %v1503, 256
      %v1506 = vpop.permute.xlu0 %1505
      %v1507 = vlaneseq
      %v1508 = vshrl.u32 %v1507, 7
      %v1509 = vsub.s32 6, %v1508
      %v1510 = vrot.slane %v1315, %v1509
      %1512 = vbcast.lane.b32.xlu0 %v1510, 256
      %v1513 = vpop.permute.xlu0 %1512
      %v1514 = vlaneseq
      %v1515 = vshrl.u32 %v1514, 7
      %v1516 = vsub.s32 7, %v1515
      %v1517 = vrot.slane %v1315, %v1516
      %1519 = vbcast.lane.b32.xlu0 %v1517, 256
      %v1520 = vpop.permute.xlu0 %1519
      %v1521 = vmul.f32 %v1471, %v1322
      %v1522 = vmul.f32 %v1478, %v1322
      %v1523 = vmul.f32 %v1485, %v1322
      %v1524 = vmul.f32 %v1492, %v1322
      %v1525 = vmul.f32 %v1499, %v1322
      %v1526 = vmul.f32 %v1506, %v1322
      %v1527 = vmul.f32 %v1513, %v1322
      %v1528 = vmul.f32 %v1520, %v1322
      %v1529 = vmul.f32 %v1521, %v1450
      %v1530 = vmul.f32 %v1522, %v1452
      %v1531 = vmul.f32 %v1523, %v1454
      %v1532 = vmul.f32 %v1524, %v1456
      %v1533 = vmul.f32 %v1525, %v1458
      %v1534 = vmul.f32 %v1526, %v1460
      %v1535 = vmul.f32 %v1527, %v1462
      %v1536 = vmul.f32 %v1528, %v1464
      %v1537 = vrot.slane %v1529, 4
      %v1538 = vadd.f32 %v1529, %v1537
      %v1539 = vrot.slane %v1538, 2
      %v1540 = vadd.f32 %v1538, %v1539
      %v1541 = vrot.slane %v1540, 1
      %v1542 = vadd.f32 %v1540, %v1541
      %v1543 = vrot.slane %v1530, 4
      %v1544 = vadd.f32 %v1530, %v1543
      %v1545 = vrot.slane %v1544, 2
      %v1546 = vadd.f32 %v1544, %v1545
      %v1547 = vrot.slane %v1546, 1
      %v1548 = vadd.f32 %v1546, %v1547
      %v1549 = vrot.slane %v1531, 4
      %v1550 = vadd.f32 %v1531, %v1549
      %v1551 = vrot.slane %v1550, 2
      %v1552 = vadd.f32 %v1550, %v1551
      %v1553 = vrot.slane %v1552, 1
      %v1554 = vadd.f32 %v1552, %v1553
      %v1555 = vrot.slane %v1532, 4
      %v1556 = vadd.f32 %v1532, %v1555
      %v1557 = vrot.slane %v1556, 2
      %v1558 = vadd.f32 %v1556, %v1557
      %v1559 = vrot.slane %v1558, 1
      %v1560 = vadd.f32 %v1558, %v1559
      %v1561 = vrot.slane %v1533, 4
      %v1562 = vadd.f32 %v1533, %v1561
      %v1563 = vrot.slane %v1562, 2
      %v1564 = vadd.f32 %v1562, %v1563
      %v1565 = vrot.slane %v1564, 1
      %v1566 = vadd.f32 %v1564, %v1565
      %v1567 = vrot.slane %v1534, 4
      %v1568 = vadd.f32 %v1534, %v1567
      %v1569 = vrot.slane %v1568, 2
      %v1570 = vadd.f32 %v1568, %v1569
      %v1571 = vrot.slane %v1570, 1
      %v1572 = vadd.f32 %v1570, %v1571
      %v1573 = vrot.slane %v1535, 4
      %v1574 = vadd.f32 %v1535, %v1573
      %v1575 = vrot.slane %v1574, 2
      %v1576 = vadd.f32 %v1574, %v1575
      %v1577 = vrot.slane %v1576, 1
      %v1578 = vadd.f32 %v1576, %v1577
      %v1579 = vrot.slane %v1536, 4
      %v1580 = vadd.f32 %v1536, %v1579
      %v1581 = vrot.slane %v1580, 2
      %v1582 = vadd.f32 %v1580, %v1581
      %v1583 = vrot.slane %v1582, 1
      %v1584 = vadd.f32 %v1582, %v1583
      %v1593 = vsel %vm1132, %v1548, %v1542
      %v1594 = vsel %vm1134, %v1554, %v1593
      %v1595 = vsel %vm1136, %v1560, %v1594
      %v1596 = vsel %vm1138, %v1566, %v1595
      %v1597 = vsel %vm1140, %v1572, %v1596
      %v1598 = vsel %vm1142, %v1578, %v1597
      %v1599 = vsel %vm1144, %v1584, %v1598
      %v1601 = vmul.f32 %v1122, %v1599
      %v1602 = vlog2.pop %v1601
      %v1603 = vmul.f32 %v1602, 0.6931472
      %v1604 = vmul.f32 %v738, %v1603
      %v1605 = vsub.f32 %v1604, %v1601
      %1606 = vadd.xlane.f32.xlu0 %v1605
      %v1607 = vpop.xlane.xlu0 %1606
      %v1608 = vrot.slane %v1607, 4
      %v1609 = vadd.f32 %v1607, %v1608
      %v1610 = vrot.slane %v1609, 2
      %v1611 = vadd.f32 %v1609, %v1610
      %v1612 = vrot.slane %v1611, 1
      %v1613 = vadd.f32 %v1611, %v1612
      %s1614 = vtos %v1613
      %s1615 = ssub.f32 %s1614, %s748
      %v1616 = vlog2.pop %v1319
      %v1617 = vmul.f32 %v1616, 0.6931472
      %v1618 = vlog2.pop %v1320
      %v1619 = vmul.f32 %v1618, 0.6931472
      %v1620 = vlog2.pop %v1322
      %v1621 = vmul.f32 %v1620, 0.6931472
      %v1622 = vmul.f32 %v1617, -0.7
      %v1623 = vmul.f32 %v1619, -0.7
      %v1624 = vadd.f32 %v1622, -1.4569899
      %v1625 = vadd.f32 %v1623, -1.4569899
      %v1626 = vmul.f32 %v1319, 0.3
      %v1627 = vmul.f32 %v1320, 0.3
      %v1628 = vsub.f32 %v1624, %v1626
      %v1629 = vsub.f32 %v1625, %v1627
      %v1630 = vsel %vm1176, %v1628, 0.0
      %v1631 = vsel %vm1176, %v1629, 0.0
      %v1632 = vadd.f32 %v1630, %v1631
      %1633 = vadd.xlane.f32.xlu0 %v1632
      %v1634 = vpop.xlane.xlu0 %1633
      %v1635 = vrot.slane %v1634, 4
      %v1636 = vadd.f32 %v1634, %v1635
      %v1637 = vrot.slane %v1636, 2
      %v1638 = vadd.f32 %v1636, %v1637
      %v1639 = vrot.slane %v1638, 1
      %v1640 = vadd.f32 %v1638, %v1639
      %s1641 = vtos %v1640
      %v1642 = vmul.f32 %v1621, -0.7
      %v1643 = vadd.f32 %v1642, -1.4569899
      %v1644 = vmul.f32 %v1322, 0.3
      %v1645 = vsub.f32 %v1643, %v1644
      %1646 = vadd.xlane.f32.xlu0 %v1645
      %v1647 = vpop.xlane.xlu0 %1646
      %v1648 = vrot.slane %v1647, 4
      %v1649 = vadd.f32 %v1647, %v1648
      %v1650 = vrot.slane %v1649, 2
      %v1651 = vadd.f32 %v1649, %v1650
      %v1652 = vrot.slane %v1651, 1
      %v1653 = vadd.f32 %v1651, %v1652
      %s1654 = vtos %v1653
      %s1655 = sadd.f32 %s1641, %s1654
      %v1656 = vmul.f32 %v1324, -0.5
      %v1657 = vmul.f32 %v1656, %v1324
      %v1658 = vsub.f32 %v1657, 0.9189385
      %1659 = vadd.xlane.f32.xlu0 %v1658
      %v1660 = vpop.xlane.xlu0 %1659
      %v1661 = vrot.slane %v1660, 4
      %v1662 = vadd.f32 %v1660, %v1661
      %v1663 = vrot.slane %v1662, 2
      %v1664 = vadd.f32 %v1662, %v1663
      %v1665 = vrot.slane %v1664, 1
      %v1666 = vadd.f32 %v1664, %v1665
      %s1667 = vtos %v1666
      %s1668 = sadd.f32 %s1655, %s1667
      %v1669 = vmul.f32 %v1326, -0.5
      %v1670 = vmul.f32 %v1669, %v1326
      %v1671 = vsub.f32 %v1670, 0.9189385
      %v1672 = vsel %vm1219, %v1671, 0.0
      %1673 = vadd.xlane.f32.xlu0 %v1672
      %v1674 = vpop.xlane.xlu0 %1673
      %v1675 = vrot.slane %v1674, 4
      %v1676 = vadd.f32 %v1674, %v1675
      %v1677 = vrot.slane %v1676, 2
      %v1678 = vadd.f32 %v1676, %v1677
      %v1679 = vrot.slane %v1678, 1
      %v1680 = vadd.f32 %v1678, %v1679
      %s1681 = vtos %v1680
      %s1682 = sadd.f32 %s1668, %s1681
      %v1683 = vsub.f32 %v1617, %v749
      %v1684 = vsub.f32 %v1619, %v750
      %v1685 = vmul.f32 %v1683, %v787
      %v1686 = vmul.f32 %v1684, %v789
      %v1687 = vmul.f32 %v1685, -0.5
      %v1688 = vmul.f32 %v1686, -0.5
      %v1689 = vmul.f32 %v1687, %v1685
      %v1690 = vmul.f32 %v1688, %v1686
      %v1691 = vsub.f32 %v1689, %v791
      %v1692 = vsub.f32 %v1690, %v793
      %v1693 = vsub.f32 %v1691, 0.9189385
      %v1694 = vsub.f32 %v1692, 0.9189385
      %v1695 = vsub.f32 %v1693, %v1617
      %v1696 = vsub.f32 %v1694, %v1619
      %v1697 = vsel %vm1176, %v1695, 0.0
      %v1698 = vsel %vm1176, %v1696, 0.0
      %v1699 = vadd.f32 %v1697, %v1698
      %1700 = vadd.xlane.f32.xlu0 %v1699
      %v1701 = vpop.xlane.xlu0 %1700
      %v1702 = vrot.slane %v1701, 4
      %v1703 = vadd.f32 %v1701, %v1702
      %v1704 = vrot.slane %v1703, 2
      %v1705 = vadd.f32 %v1703, %v1704
      %v1706 = vrot.slane %v1705, 1
      %v1707 = vadd.f32 %v1705, %v1706
      %s1708 = vtos %v1707
      %v1709 = vsub.f32 %v1621, %v751
      %v1710 = vmul.f32 %v1709, %v811
      %v1711 = vmul.f32 %v1710, -0.5
      %v1712 = vmul.f32 %v1711, %v1710
      %v1713 = vsub.f32 %v1712, %v813
      %v1714 = vsub.f32 %v1713, 0.9189385
      %v1715 = vsub.f32 %v1714, %v1621
      %1716 = vadd.xlane.f32.xlu0 %v1715
      %v1717 = vpop.xlane.xlu0 %1716
      %v1718 = vrot.slane %v1717, 4
      %v1719 = vadd.f32 %v1717, %v1718
      %v1720 = vrot.slane %v1719, 2
      %v1721 = vadd.f32 %v1719, %v1720
      %v1722 = vrot.slane %v1721, 1
      %v1723 = vadd.f32 %v1721, %v1722
      %s1724 = vtos %v1723
      %s1725 = sadd.f32 %s1708, %s1724
      %v1726 = vsub.f32 %v1324, %v752
      %v1727 = vmul.f32 %v1726, %v831
      %v1728 = vmul.f32 %v1727, -0.5
      %v1729 = vmul.f32 %v1728, %v1727
      %v1730 = vsub.f32 %v1729, %v833
      %v1731 = vsub.f32 %v1730, 0.9189385
      %1732 = vadd.xlane.f32.xlu0 %v1731
      %v1733 = vpop.xlane.xlu0 %1732
      %v1734 = vrot.slane %v1733, 4
      %v1735 = vadd.f32 %v1733, %v1734
      %v1736 = vrot.slane %v1735, 2
      %v1737 = vadd.f32 %v1735, %v1736
      %v1738 = vrot.slane %v1737, 1
      %v1739 = vadd.f32 %v1737, %v1738
      %s1740 = vtos %v1739
      %s1741 = sadd.f32 %s1725, %s1740
      %v1742 = vsub.f32 %v1326, %v753
      %v1743 = vmul.f32 %v1742, %v851
      %v1744 = vmul.f32 %v1743, -0.5
      %v1745 = vmul.f32 %v1744, %v1743
      %v1746 = vsub.f32 %v1745, %v853
      %v1747 = vsub.f32 %v1746, 0.9189385
      %v1748 = vsel %vm1219, %v1747, 0.0
      %1749 = vadd.xlane.f32.xlu0 %v1748
      %v1750 = vpop.xlane.xlu0 %1749
      %v1751 = vrot.slane %v1750, 4
      %v1752 = vadd.f32 %v1750, %v1751
      %v1753 = vrot.slane %v1752, 2
      %v1754 = vadd.f32 %v1752, %v1753
      %v1755 = vrot.slane %v1754, 1
      %v1756 = vadd.f32 %v1754, %v1755
      %s1757 = vtos %v1756
      %s1758 = sadd.f32 %s1741, %s1757
      %v1759 = vstv %s1615
      %1760 = vst [vmem:[%s728 + $0x1] sm:$0x1] %v1759
      %v1761 = vstv %s1682
      %1762 = vst [vmem:[%s732 + $0x1] sm:$0x1] %v1761
      %s1763 = ssub.f32 0.0, %s1758
      %v1764 = vstv %s1763
      %1765 = vst [vmem:[%s736 + $0x1] sm:$0x1] %v1764
      %p1766 = scmp.lt.s32.totalorder %s31, 1
      %s1767 = scalar_select %p1766, %s31, 1
      %s1768 = smul.addr %s1767, 2
      %s1769 = scalar_lea.vmem %s17, %s1768
      %p1770 = scmp.lt.s32.totalorder %s31, 1
      %s1771 = scalar_select %p1770, %s31, 1
      %s1772 = smul.addr %s1771, 2
      %s1773 = scalar_lea.vmem %s18, %s1772
      %p1774 = scmp.lt.s32.totalorder %s31, 1
      %s1775 = scalar_select %p1774, %s31, 1
      %s1776 = smul.addr %s1775, 2
      %s1777 = scalar_lea.vmem %s19, %s1776
      // Predicated region
      $region89: #{tbip_forward_pallas.1} parent=87 // pred_check
        %p1778 = pneg %p436
      $region90: #{tbip_forward_pallas.1} parent=87 // pred_check_branch
        %1780 = sbr.rel (%p1778) target = $region92
      $region91: #{tbip_forward_pallas.1} parent=87 // pred_region
        _
      $region92: #{tbip_forward_pallas.1} parent=87 // pred_fallthru
        _
      // Predicated region
      $region93: #{tbip_forward_pallas.1} parent=87 // pred_check
        %p1781 = pneg %p462
      $region94: #{tbip_forward_pallas.1} parent=87 // pred_check_branch
        %1783 = sbr.rel (%p1781) target = $region96
      $region95: #{tbip_forward_pallas.1} parent=87 // pred_region
        _
      $region96: #{tbip_forward_pallas.1} parent=87 // pred_fallthru
        _
      // Predicated region
      $region97: #{tbip_forward_pallas.1} parent=87 // pred_check
        %p1784 = pneg %p488
      $region98: #{tbip_forward_pallas.1} parent=87 // pred_check_branch
        %1786 = sbr.rel (%p1784) target = $region100
      $region99: #{tbip_forward_pallas.1} parent=87 // pred_region
        _
      $region100: #{tbip_forward_pallas.1} parent=87 // pred_fallthru
        _
    $region88: #{tbip_forward_pallas.1} parent=5 // pred_fallthru
      _
    %p1787 = scmp.le.s32.totalorder 2, %s26
    // Predicated region
    $region101: #{tbip_forward_pallas.1} parent=5 // pred_check
      %p1788 = pneg %p1787
    $region102: #{tbip_forward_pallas.1} parent=5 // pred_check_branch
      %1790 = sbr.rel (%p1788) target = $region104
    $region103: #{tbip_forward_pallas.1} parent=5 // pred_region
      %s1791 = ssub.s32 %s26, 2
      // Predicated region
      $region105: #{tbip_forward_pallas.1} parent=103 // pred_check
        %p1792 = pneg %p442
      $region106: #{tbip_forward_pallas.1} parent=103 // pred_check_branch
        %1794 = sbr.rel (%p1792) target = $region108
      $region107: #{tbip_forward_pallas.1} parent=103 // pred_region
        %p1795 = scmp.lt.s32.totalorder %s32, 1
        %s1796 = scalar_select %p1795, %s32, 1
        %s1797 = smul.addr %s1796, 2
        %s1798 = scalar_lea.vmem %s17, %s1797
      $region108: #{tbip_forward_pallas.1} parent=103 // pred_fallthru
        _
      // Predicated region
      $region109: #{tbip_forward_pallas.1} parent=103 // pred_check
        %p1799 = pneg %p468
      $region110: #{tbip_forward_pallas.1} parent=103 // pred_check_branch
        %1801 = sbr.rel (%p1799) target = $region112
      $region111: #{tbip_forward_pallas.1} parent=103 // pred_region
        %p1802 = scmp.lt.s32.totalorder %s32, 1
        %s1803 = scalar_select %p1802, %s32, 1
        %s1804 = smul.addr %s1803, 2
        %s1805 = scalar_lea.vmem %s18, %s1804
      $region112: #{tbip_forward_pallas.1} parent=103 // pred_fallthru
        _
      // Predicated region
      $region113: #{tbip_forward_pallas.1} parent=103 // pred_check
        %p1806 = pneg %p494
      $region114: #{tbip_forward_pallas.1} parent=103 // pred_check_branch
        %1808 = sbr.rel (%p1806) target = $region116
      $region115: #{tbip_forward_pallas.1} parent=103 // pred_region
        %p1809 = scmp.lt.s32.totalorder %s32, 1
        %s1810 = scalar_select %p1809, %s32, 1
        %s1811 = smul.addr %s1810, 2
        %s1812 = scalar_lea.vmem %s19, %s1811
      $region116: #{tbip_forward_pallas.1} parent=103 // pred_fallthru
        _
    $region104: #{tbip_forward_pallas.1} parent=5 // pred_fallthru
      _
  $region6: #{tbip_forward_pallas.1} parent=0 // loop_footer
    %s30 = sadd.s32 1, %s26
  $region7: #{tbip_forward_pallas.1} parent=0 // loop_footer_branch
    %25 = sbr.rel target = $region3
  $region8: #{tbip_forward_pallas.1} parent=0 // loop_exit
    _

</llo_original>
